<compile_context>
chip_gen: v7x
topology: tpu7x:2x2x1
jax: 0.10.0
libtpu: 0.0.40
codegen_flags: <defaults>
</compile_context>

<pallas_src>
import functools

import jax
import jax.numpy as jnp
from jax import lax
from jax.experimental import pallas as pl
from jax.experimental.pallas import tpu as pltpu

LANE = 128  # lane width for the FC output pad (lane-dense final store)


def _round_up(v, m):
    return ((v + m - 1) // m) * m


# ----------------------------------------------------------------------------
# Fused Pallas kernel: all LSTM layers + FC + sigmoid for one batch tile
# ----------------------------------------------------------------------------
def _fused_lstm_fc_kernel(x_ref, wih_ref, whh_ref, b_ref, fcw_ref, fcb_ref,
                          out_ref, xproj_sc, act_sc, h_sc, c_sc):
    """
    x_ref    (T, BT, E)    f32   time-major inputs (E = true embed size, unpadded)
    wih_ref  (L, Pin, G4)  bf16  W_ih^T per layer, rows zero-padded to Pin,
                                 gate cols packed [i|f|g|o], zero-padded to G4
    whh_ref  (L, H, G4)    bf16  W_hh^T per layer, gate-packed cols
    b_ref    (L, 1, G4)    f32   b_ih + b_hh, gate-packed
    fcw_ref  (H, P)        bf16  fc.weight^T, cols zero-padded to lane width
    fcb_ref  (1, P)        f32   fc.bias, zero-padded
    out_ref  (BT, P)       f32   sigmoid(fc(h_T)); real outputs in first O lanes
    xproj_sc (T, BT, G4)   f32   scratch: hoisted per-layer input projection (+bias)
    act_sc   (T, BT, H)    f32   scratch: current layer's output sequence
    h_sc/c_sc (BT, H)      f32   scratch: recurrent state
    """
    seq_len, bt, embed = x_ref.shape
    num_layers, hidden, g4 = whh_ref.shape

    # Hoisted constants (built once, reused across the unrolled loop):
    #   sigmoid(x) = 0.5*(1 + tanh(x/2))  -> one tanh pass covers all four gates,
    #   with a lane-mask select picking tanh for the g gate, sigmoid for i/f/o.
    lane_idx = lax.broadcasted_iota(jnp.int32, (bt, g4), 1)
    g_mask = (lane_idx >= 2 * hidden) & (lane_idx < 3 * hidden)
    scale = jnp.where(g_mask, jnp.float32(1.0), jnp.float32(0.5))

    # Full unroll only for short sequences; partial unroll bounds live ranges.
    unroll = True if seq_len <= 16 else 4

    for layer in range(num_layers):                    # L is tiny & static
        in_dim = embed if layer == 0 else hidden
        is_last = layer == num_layers - 1

        # ---- Hoisted input projection: one high-M matmul per layer ----------
        if layer == 0:
            xin = x_ref[...].reshape(seq_len * bt, in_dim)
        else:
            xin = act_sc[...].reshape(seq_len * bt, in_dim)
        w_in = wih_ref[layer]                          # (Pin, G4) bf16
        if in_dim != w_in.shape[0]:
            w_in = w_in[:in_dim, :]
        xproj = jnp.dot(xin.astype(jnp.bfloat16), w_in,
                        preferred_element_type=jnp.float32) + b_ref[layer]
        xproj_sc[...] = xproj.reshape(seq_len, bt, g4)

        w_hh = whh_ref[layer]                          # (H, G4) bf16

        h_sc[...] = jnp.zeros_like(h_sc)
        c_sc[...] = jnp.zeros_like(c_sc)

        def step(t, carry):
            # Recurrent matmul only: (BT, H) @ (H, G4); input side precomputed.
            gates = xproj_sc[t] + jnp.dot(
                h_sc[...].astype(jnp.bfloat16), w_hh,
                preferred_element_type=jnp.float32)            # (BT, G4) f32
            th = jnp.tanh(gates * scale)                       # one EUP pass
            act = jnp.where(g_mask, th, 0.5 * (th + 1.0))      # i,f,o=sigmoid; g=tanh
            i_g = act[:, 0 * hidden:1 * hidden]
            f_g = act[:, 1 * hidden:2 * hidden]
            g_g = act[:, 2 * hidden:3 * hidden]
            o_g = act[:, 3 * hidden:4 * hidden]
            c_new = f_g * c_sc[...] + i_g * g_g
            h_new = o_g * jnp.tanh(c_new)
            c_sc[...] = c_new
            h_sc[...] = h_new
            if not is_last:                  # last layer only needs h at t = T-1
                act_sc[t] = h_new
            return carry

        lax.fori_loop(0, seq_len, step, 0, unroll=unroll)

    # ---- Final linear + sigmoid on the last timestep's hidden state ---------
    logits = jnp.dot(h_sc[...].astype(jnp.bfloat16), fcw_ref[...],
                     preferred_element_type=jnp.float32) + fcb_ref[...]
    out_ref[...] = jax.nn.sigmoid(logits).astype(out_ref.dtype)


# ----------------------------------------------------------------------------
# Parameter init (PyTorch defaults) and packing into the kernel layout
# ----------------------------------------------------------------------------
def init_params(key, embed_size, hidden_size, output_size, num_layers):
    """Raw torch-layout params: LSTM & Linear ~ U(-1/sqrt(H), 1/sqrt(H))."""
    keys = jax.random.split(key, 4 * num_layers + 2)
    k_iter = iter(keys)
    k = hidden_size ** -0.5

    lstm_layers = []
    for layer in range(num_layers):
        in_size = embed_size if layer == 0 else hidden_size
        lstm_layers.append({
            "w_ih": jax.random.uniform(next(k_iter), (4 * hidden_size, in_size),
                                       jnp.float32, -k, k),
            "w_hh": jax.random.uniform(next(k_iter), (4 * hidden_size, hidden_size),
                                       jnp.float32, -k, k),
            "b_ih": jax.random.uniform(next(k_iter), (4 * hidden_size,),
                                       jnp.float32, -k, k),
            "b_hh": jax.random.uniform(next(k_iter), (4 * hidden_size,),
                                       jnp.float32, -k, k),
        })
    fc_w = jax.random.uniform(next(k_iter), (output_size, hidden_size),
                              jnp.float32, -k, k)
    fc_b = jax.random.uniform(next(k_iter), (output_size,), jnp.float32, -k, k)
    return {"lstm": lstm_layers, "fc_w": fc_w, "fc_b": fc_b}


def pack_params(raw, lane=LANE):
    """Transpose, gate-pack (contiguous [i|f|g|o]) and zero-pad weights."""
    lstm = raw["lstm"]
    hidden = lstm[0]["w_hh"].shape[1]
    embed = lstm[0]["w_ih"].shape[1]
    out_size = raw["fc_w"].shape[0]
    g4 = _round_up(4 * hidden, lane)             # packed gate width (no per-gate pad)
    pin = _round_up(max(embed, hidden), 8)
    assert out_size <= lane

    wih, whh, bias = [], [], []
    for lp in lstm:
        in_dim = lp["w_ih"].shape[1]
        w_ih_t = lp["w_ih"].T                    # (in_dim, 4H), gates packed [i|f|g|o]
        w_hh_t = lp["w_hh"].T                    # (H, 4H)
        wih.append(jnp.pad(w_ih_t, ((0, pin - in_dim), (0, g4 - 4 * hidden))))
        whh.append(jnp.pad(w_hh_t, ((0, 0), (0, g4 - 4 * hidden))))
        bias.append(jnp.pad(lp["b_ih"] + lp["b_hh"], (0, g4 - 4 * hidden))[None, :])

    fc_w_p = jnp.pad(raw["fc_w"].T, ((0, 0), (0, lane - out_size)))   # (H, lane)
    fc_b_p = jnp.pad(raw["fc_b"], (0, lane - out_size))[None, :]      # (1, lane)

    return {
        "wih": jnp.stack(wih).astype(jnp.bfloat16),   # (L, Pin, G4)
        "whh": jnp.stack(whh).astype(jnp.bfloat16),   # (L, H, G4)
        "b": jnp.stack(bias).astype(jnp.float32),     # (L, 1, G4)
        "fc_w": fc_w_p.astype(jnp.bfloat16),          # (H, lane)
        "fc_b": fc_b_p.astype(jnp.float32),           # (1, lane)
    }


# ----------------------------------------------------------------------------
# Forward wrapper (single pallas_call)
# ----------------------------------------------------------------------------
@functools.partial(jax.jit, static_argnames=("output_size",))
def sentiment_forward(packed, x, *, output_size):
    batch, seq_len, embed = x.shape
    num_layers, hidden, g4 = packed["whh"].shape
    pin = packed["wih"].shape[1]
    lane = packed["fc_w"].shape[1]
    assert embed <= pin

    # Batch tile: aim for >=2 grid steps once batch >= 16 so v7x's second
    # TensorCore gets work; single tile otherwise.  No-op on v5e/v6e (1 TC).
    b_pad8 = max(8, _round_up(batch, 8))
    if b_pad8 < 16:
        b_tile = b_pad8
    else:
        b_tile = min(128, _round_up((b_pad8 + 1) // 2, 8))
    b_pad = _round_up(b_pad8, b_tile)
    grid = (b_pad // b_tile,)

    # Time-major, batch-padded; embed kept at its true width (no 128-lane pad).
    x_tm = jnp.transpose(x, (1, 0, 2))
    x_tm = jnp.pad(x_tm, ((0, 0), (0, b_pad - batch), (0, 0))).astype(jnp.float32)

    # VMEM budget from the actual footprint (inputs/outputs double-buffered).
    est = (2 * seq_len * b_tile * embed * 4                                   # x
           + 2 * (num_layers * (pin + hidden) * g4 + hidden * lane) * 2       # weights
           + 2 * (num_layers * g4 + lane) * 4                                 # biases
           + 2 * b_tile * lane * 4                                            # out
           + seq_len * b_tile * (g4 + hidden) * 4                             # xproj+act
           + 2 * b_tile * hidden * 4)                                         # h, c
    vmem_limit = min(64 * 1024 * 1024, max(32 * 1024 * 1024, int(1.5 * est)))
    # TODO(synk): for long sequences, additionally tile T (or stream x / xproj
    # with a manual double buffer) so the (T, BT, G4)-scaling buffers stay
    # within v7x's 64 MiB VMEM; at these shapes everything fits comfortably.

    out = pl.pallas_call(
        _fused_lstm_fc_kernel,
        out_shape=jax.ShapeDtypeStruct((b_pad, lane), jnp.float32),
        grid=grid,
        in_specs=[
            pl.BlockSpec((seq_len, b_tile, embed), lambda i: (0, i, 0)),
            # Weight/bias index maps are constant across the grid, so their
            # blocks are not re-fetched per step.  (Single-buffering them via
            # pipeline_mode is skipped: VMEM savings are negligible here.)
            pl.BlockSpec((num_layers, pin, g4), lambda i: (0, 0, 0)),
            pl.BlockSpec((num_layers, hidden, g4), lambda i: (0, 0, 0)),
            pl.BlockSpec((num_layers, 1, g4), lambda i: (0, 0, 0)),
            pl.BlockSpec((hidden, lane), lambda i: (0, 0)),
            pl.BlockSpec((1, lane), lambda i: (0, 0)),
        ],
        out_specs=pl.BlockSpec((b_tile, lane), lambda i: (i, 0)),
        scratch_shapes=[
            pltpu.VMEM((seq_len, b_tile, g4), jnp.float32),      # hoisted x-projection
            pltpu.VMEM((seq_len, b_tile, hidden), jnp.float32),  # inter-layer acts
            pltpu.VMEM((b_tile, hidden), jnp.float32),           # h state
            pltpu.VMEM((b_tile, hidden), jnp.float32),           # c state
        ],
        compiler_params=pltpu.CompilerParams(
            dimension_semantics=("parallel",),
            vmem_limit_bytes=vmem_limit),
    )(x_tm, packed["wih"], packed["whh"], packed["b"],
      packed["fc_w"], packed["fc_b"])

    return out[:batch, :output_size]


# ----------------------------------------------------------------------------
# Pure-JAX reference (torch.nn.LSTM semantics, f32) for correctness checking
# ----------------------------------------------------------------------------
def reference_forward(raw, x):
    h_seq = x
    for lp in raw["lstm"]:
        hidden = lp["w_hh"].shape[1]
        batch, seq_len, _ = h_seq.shape
        h = jnp.zeros((batch, hidden), jnp.float32)
        c = jnp.zeros((batch, hidden), jnp.float32)
        outs = []
        for t in range(seq_len):
            g = (h_seq[:, t, :] @ lp["w_ih"].T + h @ lp["w_hh"].T
                 + lp["b_ih"] + lp["b_hh"])
            i_g = jax.nn.sigmoid(g[:, :hidden])
            f_g = jax.nn.sigmoid(g[:, hidden:2 * hidden])
            g_g = jnp.tanh(g[:, 2 * hidden:3 * hidden])
            o_g = jax.nn.sigmoid(g[:, 3 * hidden:])
            c = f_g * c + i_g * g_g
            h = o_g * jnp.tanh(c)
            outs.append(h)
        h_seq = jnp.stack(outs, axis=1)
    logits = h_seq[:, -1, :] @ raw["fc_w"].T + raw["fc_b"]
    return jax.nn.sigmoid(logits)


# ----------------------------------------------------------------------------
if __name__ == "__main__":
    EMBED, HIDDEN, OUT, LAYERS = 16, 32, 2, 2
    BATCH, SEQ = 2, 8

    key = jax.random.PRNGKey(0)
    k_params, k_x = jax.random.split(key)

    raw_params = init_params(k_params, EMBED, HIDDEN, OUT, LAYERS)
    packed_params = pack_params(raw_params)
    x = jax.random.normal(k_x, (BATCH, SEQ, EMBED), jnp.float32)

    out = sentiment_forward(packed_params, x, output_size=OUT)
    jax.block_until_ready(out)

    ref = reference_forward(raw_params, x)

    assert out.shape == (BATCH, OUT), out.shape
    assert bool(jnp.all((out >= 0.0) & (out <= 1.0)))
    assert bool(jnp.allclose(out, ref, atol=2e-2, rtol=2e-2)), (out, ref)
    print("KERNEL_OK")
</pallas_src>

<mosaic_0001>
module attributes {stable_mosaic.version = 11 : i64} {
  func.func @_fused_lstm_fc_kernel(%arg0: i32, %arg1: memref<8x8x16xf32, #tpu.memory_space<vmem>>, %arg2: memref<2x32x128xbf16, #tpu.memory_space<vmem>>, %arg3: memref<2x32x128xbf16, #tpu.memory_space<vmem>>, %arg4: memref<2x1x128xf32, #tpu.memory_space<vmem>>, %arg5: memref<32x128xbf16, #tpu.memory_space<vmem>>, %arg6: memref<1x128xf32, #tpu.memory_space<vmem>>, %arg7: memref<8x128xf32, #tpu.memory_space<vmem>>, %arg8: memref<8x8x128xf32, #tpu.memory_space<vmem>>, %arg9: memref<8x8x32xf32, #tpu.memory_space<vmem>>, %arg10: memref<8x32xf32, #tpu.memory_space<vmem>>, %arg11: memref<8x32xf32, #tpu.memory_space<vmem>>) attributes {dimension_semantics = [#tpu.dimension_semantics<parallel>], iteration_bounds = array<i64: 1>, scalar_prefetch = 0 : i64, scratch_operands = 4 : i64, tpu.core_type = #tpu.core_type<tc>, window_params = [{transform_indices = @transform_0, window_bounds = array<i64: 8, 8, 16>}, {pipeline_mode = #tpu.pipeline_mode<synchronous>, transform_indices = @transform_1, window_bounds = array<i64: 2, 32, 128>}, {pipeline_mode = #tpu.pipeline_mode<synchronous>, transform_indices = @transform_2, window_bounds = array<i64: 2, 32, 128>}, {pipeline_mode = #tpu.pipeline_mode<synchronous>, transform_indices = @transform_3, window_bounds = array<i64: 2, 1, 128>}, {pipeline_mode = #tpu.pipeline_mode<synchronous>, transform_indices = @transform_4, window_bounds = array<i64: 32, 128>}, {pipeline_mode = #tpu.pipeline_mode<synchronous>, transform_indices = @transform_5, window_bounds = array<i64: 1, 128>}, {transform_indices = @transform_6, window_bounds = array<i64: 8, 128>}]} {
    %0 = tpu.iota {dimensions = array<i32: 1>} : vector<8x128xi32>
    %c64_i32 = arith.constant 64 : i32
    %1 = vector.broadcast %c64_i32 : i32 to vector<8x128xi32>
    %2 = arith.cmpi sge, %0, %1 : vector<8x128xi32>
    %c96_i32 = arith.constant 96 : i32
    %3 = vector.broadcast %c96_i32 : i32 to vector<8x128xi32>
    %4 = arith.cmpi slt, %0, %3 : vector<8x128xi32>
    %5 = arith.andi %2, %4 : vector<8x128xi1>
    %cst = arith.constant 1.000000e+00 : f32
    %cst_0 = arith.constant 5.000000e-01 : f32
    %6 = vector.broadcast %cst : f32 to vector<8x128xf32>
    %7 = vector.broadcast %cst_0 : f32 to vector<8x128xf32>
    %8 = arith.select %5, %6, %7 : vector<8x128xi1>, vector<8x128xf32>
    %c0 = arith.constant 0 : index
    %c0_1 = arith.constant 0 : index
    %c0_2 = arith.constant 0 : index
    %9 = vector.load %arg1[%c0, %c0_1, %c0_2] : memref<8x8x16xf32, #tpu.memory_space<vmem>>, vector<8x8x16xf32>
    %10 = vector.shape_cast %9 : vector<8x8x16xf32> to vector<64x16xf32>
    %c0_3 = arith.constant 0 : index
    %c0_4 = arith.constant 0 : index
    %c0_5 = arith.constant 0 : index
    %11 = vector.load %arg2[%c0_3, %c0_4, %c0_5] : memref<2x32x128xbf16, #tpu.memory_space<vmem>>, vector<1x32x128xbf16>
    %12 = vector.shape_cast %11 : vector<1x32x128xbf16> to vector<32x128xbf16>
    %13 = vector.extract_strided_slice %12 {offsets = [0, 0], sizes = [16, 128], strides = [1, 1]} : vector<32x128xbf16> to vector<16x128xbf16>
    %14 = arith.truncf %10 : vector<64x16xf32> to vector<64x16xbf16>
    %cst_6 = arith.constant dense<0.000000e+00> : vector<64x128xf32>
    %15 = tpu.matmul %14, %13, %cst_6 {dimension_numbers = #tpu.dot_dimension_numbers<[1], [0], [0], [1], [0, 0, 1, 1], [], []>} : vector<64x16xbf16>, vector<16x128xbf16>, vector<64x128xf32> -> vector<64x128xf32>
    %c0_7 = arith.constant 0 : index
    %c0_8 = arith.constant 0 : index
    %c0_9 = arith.constant 0 : index
    %16 = vector.load %arg4[%c0_7, %c0_8, %c0_9] : memref<2x1x128xf32, #tpu.memory_space<vmem>>, vector<1x1x128xf32>
    %17 = vector.shape_cast %16 : vector<1x1x128xf32> to vector<1x128xf32>
    %18 = vector.broadcast %17 : vector<1x128xf32> to vector<64x128xf32>
    %19 = arith.addf %15, %18 : vector<64x128xf32>
    %20 = vector.shape_cast %19 : vector<64x128xf32> to vector<8x8x128xf32>
    %c0_10 = arith.constant 0 : index
    %c0_11 = arith.constant 0 : index
    %c0_12 = arith.constant 0 : index
    %21 = vector.load %arg8[%c0_10, %c0_11, %c0_12] : memref<8x8x128xf32, #tpu.memory_space<vmem>>, vector<8x8x128xf32>
    tpu.vector_store %arg8[%c0_10, %c0_11, %c0_12], %20 {strides = array<i32>} : memref<8x8x128xf32, #tpu.memory_space<vmem>>, vector<8x8x128xf32>,
    %c0_13 = arith.constant 0 : index
    %c0_14 = arith.constant 0 : index
    %c0_15 = arith.constant 0 : index
    %22 = vector.load %arg3[%c0_13, %c0_14, %c0_15] : memref<2x32x128xbf16, #tpu.memory_space<vmem>>, vector<1x32x128xbf16>
    %23 = vector.shape_cast %22 : vector<1x32x128xbf16> to vector<32x128xbf16>
    %cst_16 = arith.constant 0.000000e+00 : f32
    %24 = vector.broadcast %cst_16 : f32 to vector<8x32xf32>
    %c0_17 = arith.constant 0 : index
    %c0_18 = arith.constant 0 : index
    %25 = vector.load %arg10[%c0_17, %c0_18] : memref<8x32xf32, #tpu.memory_space<vmem>>, vector<8x32xf32>
    tpu.vector_store %arg10[%c0_17, %c0_18], %24 {strides = array<i32>} : memref<8x32xf32, #tpu.memory_space<vmem>>, vector<8x32xf32>,
    %cst_19 = arith.constant 0.000000e+00 : f32
    %26 = vector.broadcast %cst_19 : f32 to vector<8x32xf32>
    %c0_20 = arith.constant 0 : index
    %c0_21 = arith.constant 0 : index
    %27 = vector.load %arg11[%c0_20, %c0_21] : memref<8x32xf32, #tpu.memory_space<vmem>>, vector<8x32xf32>
    tpu.vector_store %arg11[%c0_20, %c0_21], %26 {strides = array<i32>} : memref<8x32xf32, #tpu.memory_space<vmem>>, vector<8x32xf32>,
    %c0_i32 = arith.constant 0 : i32
    %28 = arith.index_cast %c0_i32 : i32 to index
    %c0_22 = arith.constant 0 : index
    %c0_23 = arith.constant 0 : index
    %29 = vector.load %arg8[%28, %c0_22, %c0_23] : memref<8x8x128xf32, #tpu.memory_space<vmem>>, vector<1x8x128xf32>
    %30 = vector.shape_cast %29 : vector<1x8x128xf32> to vector<8x128xf32>
    %c0_24 = arith.constant 0 : index
    %c0_25 = arith.constant 0 : index
    %31 = vector.load %arg10[%c0_24, %c0_25] : memref<8x32xf32, #tpu.memory_space<vmem>>, vector<8x32xf32>
    %32 = arith.truncf %31 : vector<8x32xf32> to vector<8x32xbf16>
    %cst_26 = arith.constant dense<0.000000e+00> : vector<8x128xf32>
    %33 = tpu.matmul %32, %23, %cst_26 {dimension_numbers = #tpu.dot_dimension_numbers<[1], [0], [0], [1], [0, 0, 1, 1], [], []>} : vector<8x32xbf16>, vector<32x128xbf16>, vector<8x128xf32> -> vector<8x128xf32>
    %34 = arith.addf %30, %33 : vector<8x128xf32>
    %35 = arith.mulf %34, %8 : vector<8x128xf32>
    %36 = math.tanh %35 : vector<8x128xf32>
    %cst_27 = arith.constant 1.000000e+00 : f32
    %37 = vector.broadcast %cst_27 : f32 to vector<8x128xf32>
    %38 = arith.addf %36, %37 : vector<8x128xf32>
    %cst_28 = arith.constant 5.000000e-01 : f32
    %39 = vector.broadcast %cst_28 : f32 to vector<8x128xf32>
    %40 = arith.mulf %39, %38 : vector<8x128xf32>
    %41 = arith.select %5, %36, %40 : vector<8x128xi1>, vector<8x128xf32>
    %42 = vector.extract_strided_slice %41 {offsets = [0, 0], sizes = [8, 32], strides = [1, 1]} : vector<8x128xf32> to vector<8x32xf32>
    %43 = vector.extract_strided_slice %41 {offsets = [0, 32], sizes = [8, 32], strides = [1, 1]} : vector<8x128xf32> to vector<8x32xf32>
    %44 = vector.extract_strided_slice %41 {offsets = [0, 64], sizes = [8, 32], strides = [1, 1]} : vector<8x128xf32> to vector<8x32xf32>
    %45 = vector.extract_strided_slice %41 {offsets = [0, 96], sizes = [8, 32], strides = [1, 1]} : vector<8x128xf32> to vector<8x32xf32>
    %c0_29 = arith.constant 0 : index
    %c0_30 = arith.constant 0 : index
    %46 = vector.load %arg11[%c0_29, %c0_30] : memref<8x32xf32, #tpu.memory_space<vmem>>, vector<8x32xf32>
    %47 = arith.mulf %43, %46 : vector<8x32xf32>
    %48 = arith.mulf %42, %44 : vector<8x32xf32>
    %49 = arith.addf %47, %48 : vector<8x32xf32>
    %50 = math.tanh %49 : vector<8x32xf32>
    %51 = arith.mulf %45, %50 : vector<8x32xf32>
    %c0_31 = arith.constant 0 : index
    %c0_32 = arith.constant 0 : index
    %52 = vector.load %arg11[%c0_31, %c0_32] : memref<8x32xf32, #tpu.memory_space<vmem>>, vector<8x32xf32>
    tpu.vector_store %arg11[%c0_31, %c0_32], %49 {strides = array<i32>} : memref<8x32xf32, #tpu.memory_space<vmem>>, vector<8x32xf32>,
    %c0_33 = arith.constant 0 : index
    %c0_34 = arith.constant 0 : index
    %53 = vector.load %arg10[%c0_33, %c0_34] : memref<8x32xf32, #tpu.memory_space<vmem>>, vector<8x32xf32>
    tpu.vector_store %arg10[%c0_33, %c0_34], %51 {strides = array<i32>} : memref<8x32xf32, #tpu.memory_space<vmem>>, vector<8x32xf32>,
    %54 = arith.index_cast %c0_i32 : i32 to index
    %c0_35 = arith.constant 0 : index
    %c0_36 = arith.constant 0 : index
    %55 = vector.load %arg9[%54, %c0_35, %c0_36] : memref<8x8x32xf32, #tpu.memory_space<vmem>>, vector<1x8x32xf32>
    %56 = vector.shape_cast %55 : vector<1x8x32xf32> to vector<8x32xf32>
    %57 = vector.shape_cast %51 : vector<8x32xf32> to vector<1x8x32xf32>
    tpu.vector_store %arg9[%54, %c0_35, %c0_36], %57 {strides = array<i32>} : memref<8x8x32xf32, #tpu.memory_space<vmem>>, vector<1x8x32xf32>,
    %c1_i32 = arith.constant 1 : i32
    %58 = arith.index_cast %c1_i32 : i32 to index
    %c0_37 = arith.constant 0 : index
    %c0_38 = arith.constant 0 : index
    %59 = vector.load %arg8[%58, %c0_37, %c0_38] : memref<8x8x128xf32, #tpu.memory_space<vmem>>, vector<1x8x128xf32>
    %60 = vector.shape_cast %59 : vector<1x8x128xf32> to vector<8x128xf32>
    %c0_39 = arith.constant 0 : index
    %c0_40 = arith.constant 0 : index
    %61 = vector.load %arg10[%c0_39, %c0_40] : memref<8x32xf32, #tpu.memory_space<vmem>>, vector<8x32xf32>
    %62 = arith.truncf %61 : vector<8x32xf32> to vector<8x32xbf16>
    %cst_41 = arith.constant dense<0.000000e+00> : vector<8x128xf32>
    %63 = tpu.matmul %62, %23, %cst_41 {dimension_numbers = #tpu.dot_dimension_numbers<[1], [0], [0], [1], [0, 0, 1, 1], [], []>} : vector<8x32xbf16>, vector<32x128xbf16>, vector<8x128xf32> -> vector<8x128xf32>
    %64 = arith.addf %60, %63 : vector<8x128xf32>
    %65 = arith.mulf %64, %8 : vector<8x128xf32>
    %66 = math.tanh %65 : vector<8x128xf32>
    %cst_42 = arith.constant 1.000000e+00 : f32
    %67 = vector.broadcast %cst_42 : f32 to vector<8x128xf32>
    %68 = arith.addf %66, %67 : vector<8x128xf32>
    %cst_43 = arith.constant 5.000000e-01 : f32
    %69 = vector.broadcast %cst_43 : f32 to vector<8x128xf32>
    %70 = arith.mulf %69, %68 : vector<8x128xf32>
    %71 = arith.select %5, %66, %70 : vector<8x128xi1>, vector<8x128xf32>
    %72 = vector.extract_strided_slice %71 {offsets = [0, 0], sizes = [8, 32], strides = [1, 1]} : vector<8x128xf32> to vector<8x32xf32>
    %73 = vector.extract_strided_slice %71 {offsets = [0, 32], sizes = [8, 32], strides = [1, 1]} : vector<8x128xf32> to vector<8x32xf32>
    %74 = vector.extract_strided_slice %71 {offsets = [0, 64], sizes = [8, 32], strides = [1, 1]} : vector<8x128xf32> to vector<8x32xf32>
    %75 = vector.extract_strided_slice %71 {offsets = [0, 96], sizes = [8, 32], strides = [1, 1]} : vector<8x128xf32> to vector<8x32xf32>
    %c0_44 = arith.constant 0 : index
    %c0_45 = arith.constant 0 : index
    %76 = vector.load %arg11[%c0_44, %c0_45] : memref<8x32xf32, #tpu.memory_space<vmem>>, vector<8x32xf32>
    %77 = arith.mulf %73, %76 : vector<8x32xf32>
    %78 = arith.mulf %72, %74 : vector<8x32xf32>
    %79 = arith.addf %77, %78 : vector<8x32xf32>
    %80 = math.tanh %79 : vector<8x32xf32>
    %81 = arith.mulf %75, %80 : vector<8x32xf32>
    %c0_46 = arith.constant 0 : index
    %c0_47 = arith.constant 0 : index
    %82 = vector.load %arg11[%c0_46, %c0_47] : memref<8x32xf32, #tpu.memory_space<vmem>>, vector<8x32xf32>
    tpu.vector_store %arg11[%c0_46, %c0_47], %79 {strides = array<i32>} : memref<8x32xf32, #tpu.memory_space<vmem>>, vector<8x32xf32>,
    %c0_48 = arith.constant 0 : index
    %c0_49 = arith.constant 0 : index
    %83 = vector.load %arg10[%c0_48, %c0_49] : memref<8x32xf32, #tpu.memory_space<vmem>>, vector<8x32xf32>
    tpu.vector_store %arg10[%c0_48, %c0_49], %81 {strides = array<i32>} : memref<8x32xf32, #tpu.memory_space<vmem>>, vector<8x32xf32>,
    %84 = arith.index_cast %c1_i32 : i32 to index
    %c0_50 = arith.constant 0 : index
    %c0_51 = arith.constant 0 : index
    %85 = vector.load %arg9[%84, %c0_50, %c0_51] : memref<8x8x32xf32, #tpu.memory_space<vmem>>, vector<1x8x32xf32>
    %86 = vector.shape_cast %85 : vector<1x8x32xf32> to vector<8x32xf32>
    %87 = vector.shape_cast %81 : vector<8x32xf32> to vector<1x8x32xf32>
    tpu.vector_store %arg9[%84, %c0_50, %c0_51], %87 {strides = array<i32>} : memref<8x8x32xf32, #tpu.memory_space<vmem>>, vector<1x8x32xf32>,
    %c2_i32 = arith.constant 2 : i32
    %88 = arith.index_cast %c2_i32 : i32 to index
    %c0_52 = arith.constant 0 : index
    %c0_53 = arith.constant 0 : index
    %89 = vector.load %arg8[%88, %c0_52, %c0_53] : memref<8x8x128xf32, #tpu.memory_space<vmem>>, vector<1x8x128xf32>
    %90 = vector.shape_cast %89 : vector<1x8x128xf32> to vector<8x128xf32>
    %c0_54 = arith.constant 0 : index
    %c0_55 = arith.constant 0 : index
    %91 = vector.load %arg10[%c0_54, %c0_55] : memref<8x32xf32, #tpu.memory_space<vmem>>, vector<8x32xf32>
    %92 = arith.truncf %91 : vector<8x32xf32> to vector<8x32xbf16>
    %cst_56 = arith.constant dense<0.000000e+00> : vector<8x128xf32>
    %93 = tpu.matmul %92, %23, %cst_56 {dimension_numbers = #tpu.dot_dimension_numbers<[1], [0], [0], [1], [0, 0, 1, 1], [], []>} : vector<8x32xbf16>, vector<32x128xbf16>, vector<8x128xf32> -> vector<8x128xf32>
    %94 = arith.addf %90, %93 : vector<8x128xf32>
    %95 = arith.mulf %94, %8 : vector<8x128xf32>
    %96 = math.tanh %95 : vector<8x128xf32>
    %cst_57 = arith.constant 1.000000e+00 : f32
    %97 = vector.broadcast %cst_57 : f32 to vector<8x128xf32>
    %98 = arith.addf %96, %97 : vector<8x128xf32>
    %cst_58 = arith.constant 5.000000e-01 : f32
    %99 = vector.broadcast %cst_58 : f32 to vector<8x128xf32>
    %100 = arith.mulf %99, %98 : vector<8x128xf32>
    %101 = arith.select %5, %96, %100 : vector<8x128xi1>, vector<8x128xf32>
    %102 = vector.extract_strided_slice %101 {offsets = [0, 0], sizes = [8, 32], strides = [1, 1]} : vector<8x128xf32> to vector<8x32xf32>
    %103 = vector.extract_strided_slice %101 {offsets = [0, 32], sizes = [8, 32], strides = [1, 1]} : vector<8x128xf32> to vector<8x32xf32>
    %104 = vector.extract_strided_slice %101 {offsets = [0, 64], sizes = [8, 32], strides = [1, 1]} : vector<8x128xf32> to vector<8x32xf32>
    %105 = vector.extract_strided_slice %101 {offsets = [0, 96], sizes = [8, 32], strides = [1, 1]} : vector<8x128xf32> to vector<8x32xf32>
    %c0_59 = arith.constant 0 : index
    %c0_60 = arith.constant 0 : index
    %106 = vector.load %arg11[%c0_59, %c0_60] : memref<8x32xf32, #tpu.memory_space<vmem>>, vector<8x32xf32>
    %107 = arith.mulf %103, %106 : vector<8x32xf32>
    %108 = arith.mulf %102, %104 : vector<8x32xf32>
    %109 = arith.addf %107, %108 : vector<8x32xf32>
    %110 = math.tanh %109 : vector<8x32xf32>
    %111 = arith.mulf %105, %110 : vector<8x32xf32>
    %c0_61 = arith.constant 0 : index
    %c0_62 = arith.constant 0 : index
    %112 = vector.load %arg11[%c0_61, %c0_62] : memref<8x32xf32, #tpu.memory_space<vmem>>, vector<8x32xf32>
    tpu.vector_store %arg11[%c0_61, %c0_62], %109 {strides = array<i32>} : memref<8x32xf32, #tpu.memory_space<vmem>>, vector<8x32xf32>,
    %c0_63 = arith.constant 0 : index
    %c0_64 = arith.constant 0 : index
    %113 = vector.load %arg10[%c0_63, %c0_64] : memref<8x32xf32, #tpu.memory_space<vmem>>, vector<8x32xf32>
    tpu.vector_store %arg10[%c0_63, %c0_64], %111 {strides = array<i32>} : memref<8x32xf32, #tpu.memory_space<vmem>>, vector<8x32xf32>,
    %114 = arith.index_cast %c2_i32 : i32 to index
    %c0_65 = arith.constant 0 : index
    %c0_66 = arith.constant 0 : index
    %115 = vector.load %arg9[%114, %c0_65, %c0_66] : memref<8x8x32xf32, #tpu.memory_space<vmem>>, vector<1x8x32xf32>
    %116 = vector.shape_cast %115 : vector<1x8x32xf32> to vector<8x32xf32>
    %117 = vector.shape_cast %111 : vector<8x32xf32> to vector<1x8x32xf32>
    tpu.vector_store %arg9[%114, %c0_65, %c0_66], %117 {strides = array<i32>} : memref<8x8x32xf32, #tpu.memory_space<vmem>>, vector<1x8x32xf32>,
    %c3_i32 = arith.constant 3 : i32
    %118 = arith.index_cast %c3_i32 : i32 to index
    %c0_67 = arith.constant 0 : index
    %c0_68 = arith.constant 0 : index
    %119 = vector.load %arg8[%118, %c0_67, %c0_68] : memref<8x8x128xf32, #tpu.memory_space<vmem>>, vector<1x8x128xf32>
    %120 = vector.shape_cast %119 : vector<1x8x128xf32> to vector<8x128xf32>
    %c0_69 = arith.constant 0 : index
    %c0_70 = arith.constant 0 : index
    %121 = vector.load %arg10[%c0_69, %c0_70] : memref<8x32xf32, #tpu.memory_space<vmem>>, vector<8x32xf32>
    %122 = arith.truncf %121 : vector<8x32xf32> to vector<8x32xbf16>
    %cst_71 = arith.constant dense<0.000000e+00> : vector<8x128xf32>
    %123 = tpu.matmul %122, %23, %cst_71 {dimension_numbers = #tpu.dot_dimension_numbers<[1], [0], [0], [1], [0, 0, 1, 1], [], []>} : vector<8x32xbf16>, vector<32x128xbf16>, vector<8x128xf32> -> vector<8x128xf32>
    %124 = arith.addf %120, %123 : vector<8x128xf32>
    %125 = arith.mulf %124, %8 : vector<8x128xf32>
    %126 = math.tanh %125 : vector<8x128xf32>
    %cst_72 = arith.constant 1.000000e+00 : f32
    %127 = vector.broadcast %cst_72 : f32 to vector<8x128xf32>
    %128 = arith.addf %126, %127 : vector<8x128xf32>
    %cst_73 = arith.constant 5.000000e-01 : f32
    %129 = vector.broadcast %cst_73 : f32 to vector<8x128xf32>
    %130 = arith.mulf %129, %128 : vector<8x128xf32>
    %131 = arith.select %5, %126, %130 : vector<8x128xi1>, vector<8x128xf32>
    %132 = vector.extract_strided_slice %131 {offsets = [0, 0], sizes = [8, 32], strides = [1, 1]} : vector<8x128xf32> to vector<8x32xf32>
    %133 = vector.extract_strided_slice %131 {offsets = [0, 32], sizes = [8, 32], strides = [1, 1]} : vector<8x128xf32> to vector<8x32xf32>
    %134 = vector.extract_strided_slice %131 {offsets = [0, 64], sizes = [8, 32], strides = [1, 1]} : vector<8x128xf32> to vector<8x32xf32>
    %135 = vector.extract_strided_slice %131 {offsets = [0, 96], sizes = [8, 32], strides = [1, 1]} : vector<8x128xf32> to vector<8x32xf32>
    %c0_74 = arith.constant 0 : index
    %c0_75 = arith.constant 0 : index
    %136 = vector.load %arg11[%c0_74, %c0_75] : memref<8x32xf32, #tpu.memory_space<vmem>>, vector<8x32xf32>
    %137 = arith.mulf %133, %136 : vector<8x32xf32>
    %138 = arith.mulf %132, %134 : vector<8x32xf32>
    %139 = arith.addf %137, %138 : vector<8x32xf32>
    %140 = math.tanh %139 : vector<8x32xf32>
    %141 = arith.mulf %135, %140 : vector<8x32xf32>
    %c0_76 = arith.constant 0 : index
    %c0_77 = arith.constant 0 : index
    %142 = vector.load %arg11[%c0_76, %c0_77] : memref<8x32xf32, #tpu.memory_space<vmem>>, vector<8x32xf32>
    tpu.vector_store %arg11[%c0_76, %c0_77], %139 {strides = array<i32>} : memref<8x32xf32, #tpu.memory_space<vmem>>, vector<8x32xf32>,
    %c0_78 = arith.constant 0 : index
    %c0_79 = arith.constant 0 : index
    %143 = vector.load %arg10[%c0_78, %c0_79] : memref<8x32xf32, #tpu.memory_space<vmem>>, vector<8x32xf32>
    tpu.vector_store %arg10[%c0_78, %c0_79], %141 {strides = array<i32>} : memref<8x32xf32, #tpu.memory_space<vmem>>, vector<8x32xf32>,
    %144 = arith.index_cast %c3_i32 : i32 to index
    %c0_80 = arith.constant 0 : index
    %c0_81 = arith.constant 0 : index
    %145 = vector.load %arg9[%144, %c0_80, %c0_81] : memref<8x8x32xf32, #tpu.memory_space<vmem>>, vector<1x8x32xf32>
    %146 = vector.shape_cast %145 : vector<1x8x32xf32> to vector<8x32xf32>
    %147 = vector.shape_cast %141 : vector<8x32xf32> to vector<1x8x32xf32>
    tpu.vector_store %arg9[%144, %c0_80, %c0_81], %147 {strides = array<i32>} : memref<8x8x32xf32, #tpu.memory_space<vmem>>, vector<1x8x32xf32>,
    %c4_i32 = arith.constant 4 : i32
    %148 = arith.index_cast %c4_i32 : i32 to index
    %c0_82 = arith.constant 0 : index
    %c0_83 = arith.constant 0 : index
    %149 = vector.load %arg8[%148, %c0_82, %c0_83] : memref<8x8x128xf32, #tpu.memory_space<vmem>>, vector<1x8x128xf32>
    %150 = vector.shape_cast %149 : vector<1x8x128xf32> to vector<8x128xf32>
    %c0_84 = arith.constant 0 : index
    %c0_85 = arith.constant 0 : index
    %151 = vector.load %arg10[%c0_84, %c0_85] : memref<8x32xf32, #tpu.memory_space<vmem>>, vector<8x32xf32>
    %152 = arith.truncf %151 : vector<8x32xf32> to vector<8x32xbf16>
    %cst_86 = arith.constant dense<0.000000e+00> : vector<8x128xf32>
    %153 = tpu.matmul %152, %23, %cst_86 {dimension_numbers = #tpu.dot_dimension_numbers<[1], [0], [0], [1], [0, 0, 1, 1], [], []>} : vector<8x32xbf16>, vector<32x128xbf16>, vector<8x128xf32> -> vector<8x128xf32>
    %154 = arith.addf %150, %153 : vector<8x128xf32>
    %155 = arith.mulf %154, %8 : vector<8x128xf32>
    %156 = math.tanh %155 : vector<8x128xf32>
    %cst_87 = arith.constant 1.000000e+00 : f32
    %157 = vector.broadcast %cst_87 : f32 to vector<8x128xf32>
    %158 = arith.addf %156, %157 : vector<8x128xf32>
    %cst_88 = arith.constant 5.000000e-01 : f32
    %159 = vector.broadcast %cst_88 : f32 to vector<8x128xf32>
    %160 = arith.mulf %159, %158 : vector<8x128xf32>
    %161 = arith.select %5, %156, %160 : vector<8x128xi1>, vector<8x128xf32>
    %162 = vector.extract_strided_slice %161 {offsets = [0, 0], sizes = [8, 32], strides = [1, 1]} : vector<8x128xf32> to vector<8x32xf32>
    %163 = vector.extract_strided_slice %161 {offsets = [0, 32], sizes = [8, 32], strides = [1, 1]} : vector<8x128xf32> to vector<8x32xf32>
    %164 = vector.extract_strided_slice %161 {offsets = [0, 64], sizes = [8, 32], strides = [1, 1]} : vector<8x128xf32> to vector<8x32xf32>
    %165 = vector.extract_strided_slice %161 {offsets = [0, 96], sizes = [8, 32], strides = [1, 1]} : vector<8x128xf32> to vector<8x32xf32>
    %c0_89 = arith.constant 0 : index
    %c0_90 = arith.constant 0 : index
    %166 = vector.load %arg11[%c0_89, %c0_90] : memref<8x32xf32, #tpu.memory_space<vmem>>, vector<8x32xf32>
    %167 = arith.mulf %163, %166 : vector<8x32xf32>
    %168 = arith.mulf %162, %164 : vector<8x32xf32>
    %169 = arith.addf %167, %168 : vector<8x32xf32>
    %170 = math.tanh %169 : vector<8x32xf32>
    %171 = arith.mulf %165, %170 : vector<8x32xf32>
    %c0_91 = arith.constant 0 : index
    %c0_92 = arith.constant 0 : index
    %172 = vector.load %arg11[%c0_91, %c0_92] : memref<8x32xf32, #tpu.memory_space<vmem>>, vector<8x32xf32>
    tpu.vector_store %arg11[%c0_91, %c0_92], %169 {strides = array<i32>} : memref<8x32xf32, #tpu.memory_space<vmem>>, vector<8x32xf32>,
    %c0_93 = arith.constant 0 : index
    %c0_94 = arith.constant 0 : index
    %173 = vector.load %arg10[%c0_93, %c0_94] : memref<8x32xf32, #tpu.memory_space<vmem>>, vector<8x32xf32>
    tpu.vector_store %arg10[%c0_93, %c0_94], %171 {strides = array<i32>} : memref<8x32xf32, #tpu.memory_space<vmem>>, vector<8x32xf32>,
    %174 = arith.index_cast %c4_i32 : i32 to index
    %c0_95 = arith.constant 0 : index
    %c0_96 = arith.constant 0 : index
    %175 = vector.load %arg9[%174, %c0_95, %c0_96] : memref<8x8x32xf32, #tpu.memory_space<vmem>>, vector<1x8x32xf32>
    %176 = vector.shape_cast %175 : vector<1x8x32xf32> to vector<8x32xf32>
    %177 = vector.shape_cast %171 : vector<8x32xf32> to vector<1x8x32xf32>
    tpu.vector_store %arg9[%174, %c0_95, %c0_96], %177 {strides = array<i32>} : memref<8x8x32xf32, #tpu.memory_space<vmem>>, vector<1x8x32xf32>,
    %c5_i32 = arith.constant 5 : i32
    %178 = arith.index_cast %c5_i32 : i32 to index
    %c0_97 = arith.constant 0 : index
    %c0_98 = arith.constant 0 : index
    %179 = vector.load %arg8[%178, %c0_97, %c0_98] : memref<8x8x128xf32, #tpu.memory_space<vmem>>, vector<1x8x128xf32>
    %180 = vector.shape_cast %179 : vector<1x8x128xf32> to vector<8x128xf32>
    %c0_99 = arith.constant 0 : index
    %c0_100 = arith.constant 0 : index
    %181 = vector.load %arg10[%c0_99, %c0_100] : memref<8x32xf32, #tpu.memory_space<vmem>>, vector<8x32xf32>
    %182 = arith.truncf %181 : vector<8x32xf32> to vector<8x32xbf16>
    %cst_101 = arith.constant dense<0.000000e+00> : vector<8x128xf32>
    %183 = tpu.matmul %182, %23, %cst_101 {dimension_numbers = #tpu.dot_dimension_numbers<[1], [0], [0], [1], [0, 0, 1, 1], [], []>} : vector<8x32xbf16>, vector<32x128xbf16>, vector<8x128xf32> -> vector<8x128xf32>
    %184 = arith.addf %180, %183 : vector<8x128xf32>
    %185 = arith.mulf %184, %8 : vector<8x128xf32>
    %186 = math.tanh %185 : vector<8x128xf32>
    %cst_102 = arith.constant 1.000000e+00 : f32
    %187 = vector.broadcast %cst_102 : f32 to vector<8x128xf32>
    %188 = arith.addf %186, %187 : vector<8x128xf32>
    %cst_103 = arith.constant 5.000000e-01 : f32
    %189 = vector.broadcast %cst_103 : f32 to vector<8x128xf32>
    %190 = arith.mulf %189, %188 : vector<8x128xf32>
    %191 = arith.select %5, %186, %190 : vector<8x128xi1>, vector<8x128xf32>
    %192 = vector.extract_strided_slice %191 {offsets = [0, 0], sizes = [8, 32], strides = [1, 1]} : vector<8x128xf32> to vector<8x32xf32>
    %193 = vector.extract_strided_slice %191 {offsets = [0, 32], sizes = [8, 32], strides = [1, 1]} : vector<8x128xf32> to vector<8x32xf32>
    %194 = vector.extract_strided_slice %191 {offsets = [0, 64], sizes = [8, 32], strides = [1, 1]} : vector<8x128xf32> to vector<8x32xf32>
    %195 = vector.extract_strided_slice %191 {offsets = [0, 96], sizes = [8, 32], strides = [1, 1]} : vector<8x128xf32> to vector<8x32xf32>
    %c0_104 = arith.constant 0 : index
    %c0_105 = arith.constant 0 : index
    %196 = vector.load %arg11[%c0_104, %c0_105] : memref<8x32xf32, #tpu.memory_space<vmem>>, vector<8x32xf32>
    %197 = arith.mulf %193, %196 : vector<8x32xf32>
    %198 = arith.mulf %192, %194 : vector<8x32xf32>
    %199 = arith.addf %197, %198 : vector<8x32xf32>
    %200 = math.tanh %199 : vector<8x32xf32>
    %201 = arith.mulf %195, %200 : vector<8x32xf32>
    %c0_106 = arith.constant 0 : index
    %c0_107 = arith.constant 0 : index
    %202 = vector.load %arg11[%c0_106, %c0_107] : memref<8x32xf32, #tpu.memory_space<vmem>>, vector<8x32xf32>
    tpu.vector_store %arg11[%c0_106, %c0_107], %199 {strides = array<i32>} : memref<8x32xf32, #tpu.memory_space<vmem>>, vector<8x32xf32>,
    %c0_108 = arith.constant 0 : index
    %c0_109 = arith.constant 0 : index
    %203 = vector.load %arg10[%c0_108, %c0_109] : memref<8x32xf32, #tpu.memory_space<vmem>>, vector<8x32xf32>
    tpu.vector_store %arg10[%c0_108, %c0_109], %201 {strides = array<i32>} : memref<8x32xf32, #tpu.memory_space<vmem>>, vector<8x32xf32>,
    %204 = arith.index_cast %c5_i32 : i32 to index
    %c0_110 = arith.constant 0 : index
    %c0_111 = arith.constant 0 : index
    %205 = vector.load %arg9[%204, %c0_110, %c0_111] : memref<8x8x32xf32, #tpu.memory_space<vmem>>, vector<1x8x32xf32>
    %206 = vector.shape_cast %205 : vector<1x8x32xf32> to vector<8x32xf32>
    %207 = vector.shape_cast %201 : vector<8x32xf32> to vector<1x8x32xf32>
    tpu.vector_store %arg9[%204, %c0_110, %c0_111], %207 {strides = array<i32>} : memref<8x8x32xf32, #tpu.memory_space<vmem>>, vector<1x8x32xf32>,
    %c6_i32 = arith.constant 6 : i32
    %208 = arith.index_cast %c6_i32 : i32 to index
    %c0_112 = arith.constant 0 : index
    %c0_113 = arith.constant 0 : index
    %209 = vector.load %arg8[%208, %c0_112, %c0_113] : memref<8x8x128xf32, #tpu.memory_space<vmem>>, vector<1x8x128xf32>
    %210 = vector.shape_cast %209 : vector<1x8x128xf32> to vector<8x128xf32>
    %c0_114 = arith.constant 0 : index
    %c0_115 = arith.constant 0 : index
    %211 = vector.load %arg10[%c0_114, %c0_115] : memref<8x32xf32, #tpu.memory_space<vmem>>, vector<8x32xf32>
    %212 = arith.truncf %211 : vector<8x32xf32> to vector<8x32xbf16>
    %cst_116 = arith.constant dense<0.000000e+00> : vector<8x128xf32>
    %213 = tpu.matmul %212, %23, %cst_116 {dimension_numbers = #tpu.dot_dimension_numbers<[1], [0], [0], [1], [0, 0, 1, 1], [], []>} : vector<8x32xbf16>, vector<32x128xbf16>, vector<8x128xf32> -> vector<8x128xf32>
    %214 = arith.addf %210, %213 : vector<8x128xf32>
    %215 = arith.mulf %214, %8 : vector<8x128xf32>
    %216 = math.tanh %215 : vector<8x128xf32>
    %cst_117 = arith.constant 1.000000e+00 : f32
    %217 = vector.broadcast %cst_117 : f32 to vector<8x128xf32>
    %218 = arith.addf %216, %217 : vector<8x128xf32>
    %cst_118 = arith.constant 5.000000e-01 : f32
    %219 = vector.broadcast %cst_118 : f32 to vector<8x128xf32>
    %220 = arith.mulf %219, %218 : vector<8x128xf32>
    %221 = arith.select %5, %216, %220 : vector<8x128xi1>, vector<8x128xf32>
    %222 = vector.extract_strided_slice %221 {offsets = [0, 0], sizes = [8, 32], strides = [1, 1]} : vector<8x128xf32> to vector<8x32xf32>
    %223 = vector.extract_strided_slice %221 {offsets = [0, 32], sizes = [8, 32], strides = [1, 1]} : vector<8x128xf32> to vector<8x32xf32>
    %224 = vector.extract_strided_slice %221 {offsets = [0, 64], sizes = [8, 32], strides = [1, 1]} : vector<8x128xf32> to vector<8x32xf32>
    %225 = vector.extract_strided_slice %221 {offsets = [0, 96], sizes = [8, 32], strides = [1, 1]} : vector<8x128xf32> to vector<8x32xf32>
    %c0_119 = arith.constant 0 : index
    %c0_120 = arith.constant 0 : index
    %226 = vector.load %arg11[%c0_119, %c0_120] : memref<8x32xf32, #tpu.memory_space<vmem>>, vector<8x32xf32>
    %227 = arith.mulf %223, %226 : vector<8x32xf32>
    %228 = arith.mulf %222, %224 : vector<8x32xf32>
    %229 = arith.addf %227, %228 : vector<8x32xf32>
    %230 = math.tanh %229 : vector<8x32xf32>
    %231 = arith.mulf %225, %230 : vector<8x32xf32>
    %c0_121 = arith.constant 0 : index
    %c0_122 = arith.constant 0 : index
    %232 = vector.load %arg11[%c0_121, %c0_122] : memref<8x32xf32, #tpu.memory_space<vmem>>, vector<8x32xf32>
    tpu.vector_store %arg11[%c0_121, %c0_122], %229 {strides = array<i32>} : memref<8x32xf32, #tpu.memory_space<vmem>>, vector<8x32xf32>,
    %c0_123 = arith.constant 0 : index
    %c0_124 = arith.constant 0 : index
    %233 = vector.load %arg10[%c0_123, %c0_124] : memref<8x32xf32, #tpu.memory_space<vmem>>, vector<8x32xf32>
    tpu.vector_store %arg10[%c0_123, %c0_124], %231 {strides = array<i32>} : memref<8x32xf32, #tpu.memory_space<vmem>>, vector<8x32xf32>,
    %234 = arith.index_cast %c6_i32 : i32 to index
    %c0_125 = arith.constant 0 : index
    %c0_126 = arith.constant 0 : index
    %235 = vector.load %arg9[%234, %c0_125, %c0_126] : memref<8x8x32xf32, #tpu.memory_space<vmem>>, vector<1x8x32xf32>
    %236 = vector.shape_cast %235 : vector<1x8x32xf32> to vector<8x32xf32>
    %237 = vector.shape_cast %231 : vector<8x32xf32> to vector<1x8x32xf32>
    tpu.vector_store %arg9[%234, %c0_125, %c0_126], %237 {strides = array<i32>} : memref<8x8x32xf32, #tpu.memory_space<vmem>>, vector<1x8x32xf32>,
    %c7_i32 = arith.constant 7 : i32
    %238 = arith.index_cast %c7_i32 : i32 to index
    %c0_127 = arith.constant 0 : index
    %c0_128 = arith.constant 0 : index
    %239 = vector.load %arg8[%238, %c0_127, %c0_128] : memref<8x8x128xf32, #tpu.memory_space<vmem>>, vector<1x8x128xf32>
    %240 = vector.shape_cast %239 : vector<1x8x128xf32> to vector<8x128xf32>
    %c0_129 = arith.constant 0 : index
    %c0_130 = arith.constant 0 : index
    %241 = vector.load %arg10[%c0_129, %c0_130] : memref<8x32xf32, #tpu.memory_space<vmem>>, vector<8x32xf32>
    %242 = arith.truncf %241 : vector<8x32xf32> to vector<8x32xbf16>
    %cst_131 = arith.constant dense<0.000000e+00> : vector<8x128xf32>
    %243 = tpu.matmul %242, %23, %cst_131 {dimension_numbers = #tpu.dot_dimension_numbers<[1], [0], [0], [1], [0, 0, 1, 1], [], []>} : vector<8x32xbf16>, vector<32x128xbf16>, vector<8x128xf32> -> vector<8x128xf32>
    %244 = arith.addf %240, %243 : vector<8x128xf32>
    %245 = arith.mulf %244, %8 : vector<8x128xf32>
    %246 = math.tanh %245 : vector<8x128xf32>
    %cst_132 = arith.constant 1.000000e+00 : f32
    %247 = vector.broadcast %cst_132 : f32 to vector<8x128xf32>
    %248 = arith.addf %246, %247 : vector<8x128xf32>
    %cst_133 = arith.constant 5.000000e-01 : f32
    %249 = vector.broadcast %cst_133 : f32 to vector<8x128xf32>
    %250 = arith.mulf %249, %248 : vector<8x128xf32>
    %251 = arith.select %5, %246, %250 : vector<8x128xi1>, vector<8x128xf32>
    %252 = vector.extract_strided_slice %251 {offsets = [0, 0], sizes = [8, 32], strides = [1, 1]} : vector<8x128xf32> to vector<8x32xf32>
    %253 = vector.extract_strided_slice %251 {offsets = [0, 32], sizes = [8, 32], strides = [1, 1]} : vector<8x128xf32> to vector<8x32xf32>
    %254 = vector.extract_strided_slice %251 {offsets = [0, 64], sizes = [8, 32], strides = [1, 1]} : vector<8x128xf32> to vector<8x32xf32>
    %255 = vector.extract_strided_slice %251 {offsets = [0, 96], sizes = [8, 32], strides = [1, 1]} : vector<8x128xf32> to vector<8x32xf32>
    %c0_134 = arith.constant 0 : index
    %c0_135 = arith.constant 0 : index
    %256 = vector.load %arg11[%c0_134, %c0_135] : memref<8x32xf32, #tpu.memory_space<vmem>>, vector<8x32xf32>
    %257 = arith.mulf %253, %256 : vector<8x32xf32>
    %258 = arith.mulf %252, %254 : vector<8x32xf32>
    %259 = arith.addf %257, %258 : vector<8x32xf32>
    %260 = math.tanh %259 : vector<8x32xf32>
    %261 = arith.mulf %255, %260 : vector<8x32xf32>
    %c0_136 = arith.constant 0 : index
    %c0_137 = arith.constant 0 : index
    %262 = vector.load %arg11[%c0_136, %c0_137] : memref<8x32xf32, #tpu.memory_space<vmem>>, vector<8x32xf32>
    tpu.vector_store %arg11[%c0_136, %c0_137], %259 {strides = array<i32>} : memref<8x32xf32, #tpu.memory_space<vmem>>, vector<8x32xf32>,
    %c0_138 = arith.constant 0 : index
    %c0_139 = arith.constant 0 : index
    %263 = vector.load %arg10[%c0_138, %c0_139] : memref<8x32xf32, #tpu.memory_space<vmem>>, vector<8x32xf32>
    tpu.vector_store %arg10[%c0_138, %c0_139], %261 {strides = array<i32>} : memref<8x32xf32, #tpu.memory_space<vmem>>, vector<8x32xf32>,
    %264 = arith.index_cast %c7_i32 : i32 to index
    %c0_140 = arith.constant 0 : index
    %c0_141 = arith.constant 0 : index
    %265 = vector.load %arg9[%264, %c0_140, %c0_141] : memref<8x8x32xf32, #tpu.memory_space<vmem>>, vector<1x8x32xf32>
    %266 = vector.shape_cast %265 : vector<1x8x32xf32> to vector<8x32xf32>
    %267 = vector.shape_cast %261 : vector<8x32xf32> to vector<1x8x32xf32>
    tpu.vector_store %arg9[%264, %c0_140, %c0_141], %267 {strides = array<i32>} : memref<8x8x32xf32, #tpu.memory_space<vmem>>, vector<1x8x32xf32>,
    %c8_i32 = arith.constant 8 : i32
    %c0_142 = arith.constant 0 : index
    %c0_143 = arith.constant 0 : index
    %c0_144 = arith.constant 0 : index
    %268 = vector.load %arg9[%c0_142, %c0_143, %c0_144] : memref<8x8x32xf32, #tpu.memory_space<vmem>>, vector<8x8x32xf32>
    %269 = vector.shape_cast %268 : vector<8x8x32xf32> to vector<64x32xf32>
    %c1 = arith.constant 1 : index
    %c0_145 = arith.constant 0 : index
    %c0_146 = arith.constant 0 : index
    %270 = vector.load %arg2[%c1, %c0_145, %c0_146] : memref<2x32x128xbf16, #tpu.memory_space<vmem>>, vector<1x32x128xbf16>
    %271 = vector.shape_cast %270 : vector<1x32x128xbf16> to vector<32x128xbf16>
    %272 = arith.truncf %269 : vector<64x32xf32> to vector<64x32xbf16>
    %cst_147 = arith.constant dense<0.000000e+00> : vector<64x128xf32>
    %273 = tpu.matmul %272, %271, %cst_147 {dimension_numbers = #tpu.dot_dimension_numbers<[1], [0], [0], [1], [0, 0, 1, 1], [], []>} : vector<64x32xbf16>, vector<32x128xbf16>, vector<64x128xf32> -> vector<64x128xf32>
    %c1_148 = arith.constant 1 : index
    %c0_149 = arith.constant 0 : index
    %c0_150 = arith.constant 0 : index
    %274 = vector.load %arg4[%c1_148, %c0_149, %c0_150] : memref<2x1x128xf32, #tpu.memory_space<vmem>>, vector<1x1x128xf32>
    %275 = vector.shape_cast %274 : vector<1x1x128xf32> to vector<1x128xf32>
    %276 = vector.broadcast %275 : vector<1x128xf32> to vector<64x128xf32>
    %277 = arith.addf %273, %276 : vector<64x128xf32>
    %278 = vector.shape_cast %277 : vector<64x128xf32> to vector<8x8x128xf32>
    %c0_151 = arith.constant 0 : index
    %c0_152 = arith.constant 0 : index
    %c0_153 = arith.constant 0 : index
    %279 = vector.load %arg8[%c0_151, %c0_152, %c0_153] : memref<8x8x128xf32, #tpu.memory_space<vmem>>, vector<8x8x128xf32>
    tpu.vector_store %arg8[%c0_151, %c0_152, %c0_153], %278 {strides = array<i32>} : memref<8x8x128xf32, #tpu.memory_space<vmem>>, vector<8x8x128xf32>,
    %c1_154 = arith.constant 1 : index
    %c0_155 = arith.constant 0 : index
    %c0_156 = arith.constant 0 : index
    %280 = vector.load %arg3[%c1_154, %c0_155, %c0_156] : memref<2x32x128xbf16, #tpu.memory_space<vmem>>, vector<1x32x128xbf16>
    %281 = vector.shape_cast %280 : vector<1x32x128xbf16> to vector<32x128xbf16>
    %cst_157 = arith.constant 0.000000e+00 : f32
    %282 = vector.broadcast %cst_157 : f32 to vector<8x32xf32>
    %c0_158 = arith.constant 0 : index
    %c0_159 = arith.constant 0 : index
    %283 = vector.load %arg10[%c0_158, %c0_159] : memref<8x32xf32, #tpu.memory_space<vmem>>, vector<8x32xf32>
    tpu.vector_store %arg10[%c0_158, %c0_159], %282 {strides = array<i32>} : memref<8x32xf32, #tpu.memory_space<vmem>>, vector<8x32xf32>,
    %cst_160 = arith.constant 0.000000e+00 : f32
    %284 = vector.broadcast %cst_160 : f32 to vector<8x32xf32>
    %c0_161 = arith.constant 0 : index
    %c0_162 = arith.constant 0 : index
    %285 = vector.load %arg11[%c0_161, %c0_162] : memref<8x32xf32, #tpu.memory_space<vmem>>, vector<8x32xf32>
    tpu.vector_store %arg11[%c0_161, %c0_162], %284 {strides = array<i32>} : memref<8x32xf32, #tpu.memory_space<vmem>>, vector<8x32xf32>,
    %c0_i32_163 = arith.constant 0 : i32
    %286 = arith.index_cast %c0_i32_163 : i32 to index
    %c0_164 = arith.constant 0 : index
    %c0_165 = arith.constant 0 : index
    %287 = vector.load %arg8[%286, %c0_164, %c0_165] : memref<8x8x128xf32, #tpu.memory_space<vmem>>, vector<1x8x128xf32>
    %288 = vector.shape_cast %287 : vector<1x8x128xf32> to vector<8x128xf32>
    %c0_166 = arith.constant 0 : index
    %c0_167 = arith.constant 0 : index
    %289 = vector.load %arg10[%c0_166, %c0_167] : memref<8x32xf32, #tpu.memory_space<vmem>>, vector<8x32xf32>
    %290 = arith.truncf %289 : vector<8x32xf32> to vector<8x32xbf16>
    %cst_168 = arith.constant dense<0.000000e+00> : vector<8x128xf32>
    %291 = tpu.matmul %290, %281, %cst_168 {dimension_numbers = #tpu.dot_dimension_numbers<[1], [0], [0], [1], [0, 0, 1, 1], [], []>} : vector<8x32xbf16>, vector<32x128xbf16>, vector<8x128xf32> -> vector<8x128xf32>
    %292 = arith.addf %288, %291 : vector<8x128xf32>
    %293 = arith.mulf %292, %8 : vector<8x128xf32>
    %294 = math.tanh %293 : vector<8x128xf32>
    %cst_169 = arith.constant 1.000000e+00 : f32
    %295 = vector.broadcast %cst_169 : f32 to vector<8x128xf32>
    %296 = arith.addf %294, %295 : vector<8x128xf32>
    %cst_170 = arith.constant 5.000000e-01 : f32
    %297 = vector.broadcast %cst_170 : f32 to vector<8x128xf32>
    %298 = arith.mulf %297, %296 : vector<8x128xf32>
    %299 = arith.select %5, %294, %298 : vector<8x128xi1>, vector<8x128xf32>
    %300 = vector.extract_strided_slice %299 {offsets = [0, 0], sizes = [8, 32], strides = [1, 1]} : vector<8x128xf32> to vector<8x32xf32>
    %301 = vector.extract_strided_slice %299 {offsets = [0, 32], sizes = [8, 32], strides = [1, 1]} : vector<8x128xf32> to vector<8x32xf32>
    %302 = vector.extract_strided_slice %299 {offsets = [0, 64], sizes = [8, 32], strides = [1, 1]} : vector<8x128xf32> to vector<8x32xf32>
    %303 = vector.extract_strided_slice %299 {offsets = [0, 96], sizes = [8, 32], strides = [1, 1]} : vector<8x128xf32> to vector<8x32xf32>
    %c0_171 = arith.constant 0 : index
    %c0_172 = arith.constant 0 : index
    %304 = vector.load %arg11[%c0_171, %c0_172] : memref<8x32xf32, #tpu.memory_space<vmem>>, vector<8x32xf32>
    %305 = arith.mulf %301, %304 : vector<8x32xf32>
    %306 = arith.mulf %300, %302 : vector<8x32xf32>
    %307 = arith.addf %305, %306 : vector<8x32xf32>
    %308 = math.tanh %307 : vector<8x32xf32>
    %309 = arith.mulf %303, %308 : vector<8x32xf32>
    %c0_173 = arith.constant 0 : index
    %c0_174 = arith.constant 0 : index
    %310 = vector.load %arg11[%c0_173, %c0_174] : memref<8x32xf32, #tpu.memory_space<vmem>>, vector<8x32xf32>
    tpu.vector_store %arg11[%c0_173, %c0_174], %307 {strides = array<i32>} : memref<8x32xf32, #tpu.memory_space<vmem>>, vector<8x32xf32>,
    %c0_175 = arith.constant 0 : index
    %c0_176 = arith.constant 0 : index
    %311 = vector.load %arg10[%c0_175, %c0_176] : memref<8x32xf32, #tpu.memory_space<vmem>>, vector<8x32xf32>
    tpu.vector_store %arg10[%c0_175, %c0_176], %309 {strides = array<i32>} : memref<8x32xf32, #tpu.memory_space<vmem>>, vector<8x32xf32>,
    %c1_i32_177 = arith.constant 1 : i32
    %312 = arith.index_cast %c1_i32_177 : i32 to index
    %c0_178 = arith.constant 0 : index
    %c0_179 = arith.constant 0 : index
    %313 = vector.load %arg8[%312, %c0_178, %c0_179] : memref<8x8x128xf32, #tpu.memory_space<vmem>>, vector<1x8x128xf32>
    %314 = vector.shape_cast %313 : vector<1x8x128xf32> to vector<8x128xf32>
    %c0_180 = arith.constant 0 : index
    %c0_181 = arith.constant 0 : index
    %315 = vector.load %arg10[%c0_180, %c0_181] : memref<8x32xf32, #tpu.memory_space<vmem>>, vector<8x32xf32>
    %316 = arith.truncf %315 : vector<8x32xf32> to vector<8x32xbf16>
    %cst_182 = arith.constant dense<0.000000e+00> : vector<8x128xf32>
    %317 = tpu.matmul %316, %281, %cst_182 {dimension_numbers = #tpu.dot_dimension_numbers<[1], [0], [0], [1], [0, 0, 1, 1], [], []>} : vector<8x32xbf16>, vector<32x128xbf16>, vector<8x128xf32> -> vector<8x128xf32>
    %318 = arith.addf %314, %317 : vector<8x128xf32>
    %319 = arith.mulf %318, %8 : vector<8x128xf32>
    %320 = math.tanh %319 : vector<8x128xf32>
    %cst_183 = arith.constant 1.000000e+00 : f32
    %321 = vector.broadcast %cst_183 : f32 to vector<8x128xf32>
    %322 = arith.addf %320, %321 : vector<8x128xf32>
    %cst_184 = arith.constant 5.000000e-01 : f32
    %323 = vector.broadcast %cst_184 : f32 to vector<8x128xf32>
    %324 = arith.mulf %323, %322 : vector<8x128xf32>
    %325 = arith.select %5, %320, %324 : vector<8x128xi1>, vector<8x128xf32>
    %326 = vector.extract_strided_slice %325 {offsets = [0, 0], sizes = [8, 32], strides = [1, 1]} : vector<8x128xf32> to vector<8x32xf32>
    %327 = vector.extract_strided_slice %325 {offsets = [0, 32], sizes = [8, 32], strides = [1, 1]} : vector<8x128xf32> to vector<8x32xf32>
    %328 = vector.extract_strided_slice %325 {offsets = [0, 64], sizes = [8, 32], strides = [1, 1]} : vector<8x128xf32> to vector<8x32xf32>
    %329 = vector.extract_strided_slice %325 {offsets = [0, 96], sizes = [8, 32], strides = [1, 1]} : vector<8x128xf32> to vector<8x32xf32>
    %c0_185 = arith.constant 0 : index
    %c0_186 = arith.constant 0 : index
    %330 = vector.load %arg11[%c0_185, %c0_186] : memref<8x32xf32, #tpu.memory_space<vmem>>, vector<8x32xf32>
    %331 = arith.mulf %327, %330 : vector<8x32xf32>
    %332 = arith.mulf %326, %328 : vector<8x32xf32>
    %333 = arith.addf %331, %332 : vector<8x32xf32>
    %334 = math.tanh %333 : vector<8x32xf32>
    %335 = arith.mulf %329, %334 : vector<8x32xf32>
    %c0_187 = arith.constant 0 : index
    %c0_188 = arith.constant 0 : index
    %336 = vector.load %arg11[%c0_187, %c0_188] : memref<8x32xf32, #tpu.memory_space<vmem>>, vector<8x32xf32>
    tpu.vector_store %arg11[%c0_187, %c0_188], %333 {strides = array<i32>} : memref<8x32xf32, #tpu.memory_space<vmem>>, vector<8x32xf32>,
    %c0_189 = arith.constant 0 : index
    %c0_190 = arith.constant 0 : index
    %337 = vector.load %arg10[%c0_189, %c0_190] : memref<8x32xf32, #tpu.memory_space<vmem>>, vector<8x32xf32>
    tpu.vector_store %arg10[%c0_189, %c0_190], %335 {strides = array<i32>} : memref<8x32xf32, #tpu.memory_space<vmem>>, vector<8x32xf32>,
    %c2_i32_191 = arith.constant 2 : i32
    %338 = arith.index_cast %c2_i32_191 : i32 to index
    %c0_192 = arith.constant 0 : index
    %c0_193 = arith.constant 0 : index
    %339 = vector.load %arg8[%338, %c0_192, %c0_193] : memref<8x8x128xf32, #tpu.memory_space<vmem>>, vector<1x8x128xf32>
    %340 = vector.shape_cast %339 : vector<1x8x128xf32> to vector<8x128xf32>
    %c0_194 = arith.constant 0 : index
    %c0_195 = arith.constant 0 : index
    %341 = vector.load %arg10[%c0_194, %c0_195] : memref<8x32xf32, #tpu.memory_space<vmem>>, vector<8x32xf32>
    %342 = arith.truncf %341 : vector<8x32xf32> to vector<8x32xbf16>
    %cst_196 = arith.constant dense<0.000000e+00> : vector<8x128xf32>
    %343 = tpu.matmul %342, %281, %cst_196 {dimension_numbers = #tpu.dot_dimension_numbers<[1], [0], [0], [1], [0, 0, 1, 1], [], []>} : vector<8x32xbf16>, vector<32x128xbf16>, vector<8x128xf32> -> vector<8x128xf32>
    %344 = arith.addf %340, %343 : vector<8x128xf32>
    %345 = arith.mulf %344, %8 : vector<8x128xf32>
    %346 = math.tanh %345 : vector<8x128xf32>
    %cst_197 = arith.constant 1.000000e+00 : f32
    %347 = vector.broadcast %cst_197 : f32 to vector<8x128xf32>
    %348 = arith.addf %346, %347 : vector<8x128xf32>
    %cst_198 = arith.constant 5.000000e-01 : f32
    %349 = vector.broadcast %cst_198 : f32 to vector<8x128xf32>
    %350 = arith.mulf %349, %348 : vector<8x128xf32>
    %351 = arith.select %5, %346, %350 : vector<8x128xi1>, vector<8x128xf32>
    %352 = vector.extract_strided_slice %351 {offsets = [0, 0], sizes = [8, 32], strides = [1, 1]} : vector<8x128xf32> to vector<8x32xf32>
    %353 = vector.extract_strided_slice %351 {offsets = [0, 32], sizes = [8, 32], strides = [1, 1]} : vector<8x128xf32> to vector<8x32xf32>
    %354 = vector.extract_strided_slice %351 {offsets = [0, 64], sizes = [8, 32], strides = [1, 1]} : vector<8x128xf32> to vector<8x32xf32>
    %355 = vector.extract_strided_slice %351 {offsets = [0, 96], sizes = [8, 32], strides = [1, 1]} : vector<8x128xf32> to vector<8x32xf32>
    %c0_199 = arith.constant 0 : index
    %c0_200 = arith.constant 0 : index
    %356 = vector.load %arg11[%c0_199, %c0_200] : memref<8x32xf32, #tpu.memory_space<vmem>>, vector<8x32xf32>
    %357 = arith.mulf %353, %356 : vector<8x32xf32>
    %358 = arith.mulf %352, %354 : vector<8x32xf32>
    %359 = arith.addf %357, %358 : vector<8x32xf32>
    %360 = math.tanh %359 : vector<8x32xf32>
    %361 = arith.mulf %355, %360 : vector<8x32xf32>
    %c0_201 = arith.constant 0 : index
    %c0_202 = arith.constant 0 : index
    %362 = vector.load %arg11[%c0_201, %c0_202] : memref<8x32xf32, #tpu.memory_space<vmem>>, vector<8x32xf32>
    tpu.vector_store %arg11[%c0_201, %c0_202], %359 {strides = array<i32>} : memref<8x32xf32, #tpu.memory_space<vmem>>, vector<8x32xf32>,
    %c0_203 = arith.constant 0 : index
    %c0_204 = arith.constant 0 : index
    %363 = vector.load %arg10[%c0_203, %c0_204] : memref<8x32xf32, #tpu.memory_space<vmem>>, vector<8x32xf32>
    tpu.vector_store %arg10[%c0_203, %c0_204], %361 {strides = array<i32>} : memref<8x32xf32, #tpu.memory_space<vmem>>, vector<8x32xf32>,
    %c3_i32_205 = arith.constant 3 : i32
    %364 = arith.index_cast %c3_i32_205 : i32 to index
    %c0_206 = arith.constant 0 : index
    %c0_207 = arith.constant 0 : index
    %365 = vector.load %arg8[%364, %c0_206, %c0_207] : memref<8x8x128xf32, #tpu.memory_space<vmem>>, vector<1x8x128xf32>
    %366 = vector.shape_cast %365 : vector<1x8x128xf32> to vector<8x128xf32>
    %c0_208 = arith.constant 0 : index
    %c0_209 = arith.constant 0 : index
    %367 = vector.load %arg10[%c0_208, %c0_209] : memref<8x32xf32, #tpu.memory_space<vmem>>, vector<8x32xf32>
    %368 = arith.truncf %367 : vector<8x32xf32> to vector<8x32xbf16>
    %cst_210 = arith.constant dense<0.000000e+00> : vector<8x128xf32>
    %369 = tpu.matmul %368, %281, %cst_210 {dimension_numbers = #tpu.dot_dimension_numbers<[1], [0], [0], [1], [0, 0, 1, 1], [], []>} : vector<8x32xbf16>, vector<32x128xbf16>, vector<8x128xf32> -> vector<8x128xf32>
    %370 = arith.addf %366, %369 : vector<8x128xf32>
    %371 = arith.mulf %370, %8 : vector<8x128xf32>
    %372 = math.tanh %371 : vector<8x128xf32>
    %cst_211 = arith.constant 1.000000e+00 : f32
    %373 = vector.broadcast %cst_211 : f32 to vector<8x128xf32>
    %374 = arith.addf %372, %373 : vector<8x128xf32>
    %cst_212 = arith.constant 5.000000e-01 : f32
    %375 = vector.broadcast %cst_212 : f32 to vector<8x128xf32>
    %376 = arith.mulf %375, %374 : vector<8x128xf32>
    %377 = arith.select %5, %372, %376 : vector<8x128xi1>, vector<8x128xf32>
    %378 = vector.extract_strided_slice %377 {offsets = [0, 0], sizes = [8, 32], strides = [1, 1]} : vector<8x128xf32> to vector<8x32xf32>
    %379 = vector.extract_strided_slice %377 {offsets = [0, 32], sizes = [8, 32], strides = [1, 1]} : vector<8x128xf32> to vector<8x32xf32>
    %380 = vector.extract_strided_slice %377 {offsets = [0, 64], sizes = [8, 32], strides = [1, 1]} : vector<8x128xf32> to vector<8x32xf32>
    %381 = vector.extract_strided_slice %377 {offsets = [0, 96], sizes = [8, 32], strides = [1, 1]} : vector<8x128xf32> to vector<8x32xf32>
    %c0_213 = arith.constant 0 : index
    %c0_214 = arith.constant 0 : index
    %382 = vector.load %arg11[%c0_213, %c0_214] : memref<8x32xf32, #tpu.memory_space<vmem>>, vector<8x32xf32>
    %383 = arith.mulf %379, %382 : vector<8x32xf32>
    %384 = arith.mulf %378, %380 : vector<8x32xf32>
    %385 = arith.addf %383, %384 : vector<8x32xf32>
    %386 = math.tanh %385 : vector<8x32xf32>
    %387 = arith.mulf %381, %386 : vector<8x32xf32>
    %c0_215 = arith.constant 0 : index
    %c0_216 = arith.constant 0 : index
    %388 = vector.load %arg11[%c0_215, %c0_216] : memref<8x32xf32, #tpu.memory_space<vmem>>, vector<8x32xf32>
    tpu.vector_store %arg11[%c0_215, %c0_216], %385 {strides = array<i32>} : memref<8x32xf32, #tpu.memory_space<vmem>>, vector<8x32xf32>,
    %c0_217 = arith.constant 0 : index
    %c0_218 = arith.constant 0 : index
    %389 = vector.load %arg10[%c0_217, %c0_218] : memref<8x32xf32, #tpu.memory_space<vmem>>, vector<8x32xf32>
    tpu.vector_store %arg10[%c0_217, %c0_218], %387 {strides = array<i32>} : memref<8x32xf32, #tpu.memory_space<vmem>>, vector<8x32xf32>,
    %c4_i32_219 = arith.constant 4 : i32
    %390 = arith.index_cast %c4_i32_219 : i32 to index
    %c0_220 = arith.constant 0 : index
    %c0_221 = arith.constant 0 : index
    %391 = vector.load %arg8[%390, %c0_220, %c0_221] : memref<8x8x128xf32, #tpu.memory_space<vmem>>, vector<1x8x128xf32>
    %392 = vector.shape_cast %391 : vector<1x8x128xf32> to vector<8x128xf32>
    %c0_222 = arith.constant 0 : index
    %c0_223 = arith.constant 0 : index
    %393 = vector.load %arg10[%c0_222, %c0_223] : memref<8x32xf32, #tpu.memory_space<vmem>>, vector<8x32xf32>
    %394 = arith.truncf %393 : vector<8x32xf32> to vector<8x32xbf16>
    %cst_224 = arith.constant dense<0.000000e+00> : vector<8x128xf32>
    %395 = tpu.matmul %394, %281, %cst_224 {dimension_numbers = #tpu.dot_dimension_numbers<[1], [0], [0], [1], [0, 0, 1, 1], [], []>} : vector<8x32xbf16>, vector<32x128xbf16>, vector<8x128xf32> -> vector<8x128xf32>
    %396 = arith.addf %392, %395 : vector<8x128xf32>
    %397 = arith.mulf %396, %8 : vector<8x128xf32>
    %398 = math.tanh %397 : vector<8x128xf32>
    %cst_225 = arith.constant 1.000000e+00 : f32
    %399 = vector.broadcast %cst_225 : f32 to vector<8x128xf32>
    %400 = arith.addf %398, %399 : vector<8x128xf32>
    %cst_226 = arith.constant 5.000000e-01 : f32
    %401 = vector.broadcast %cst_226 : f32 to vector<8x128xf32>
    %402 = arith.mulf %401, %400 : vector<8x128xf32>
    %403 = arith.select %5, %398, %402 : vector<8x128xi1>, vector<8x128xf32>
    %404 = vector.extract_strided_slice %403 {offsets = [0, 0], sizes = [8, 32], strides = [1, 1]} : vector<8x128xf32> to vector<8x32xf32>
    %405 = vector.extract_strided_slice %403 {offsets = [0, 32], sizes = [8, 32], strides = [1, 1]} : vector<8x128xf32> to vector<8x32xf32>
    %406 = vector.extract_strided_slice %403 {offsets = [0, 64], sizes = [8, 32], strides = [1, 1]} : vector<8x128xf32> to vector<8x32xf32>
    %407 = vector.extract_strided_slice %403 {offsets = [0, 96], sizes = [8, 32], strides = [1, 1]} : vector<8x128xf32> to vector<8x32xf32>
    %c0_227 = arith.constant 0 : index
    %c0_228 = arith.constant 0 : index
    %408 = vector.load %arg11[%c0_227, %c0_228] : memref<8x32xf32, #tpu.memory_space<vmem>>, vector<8x32xf32>
    %409 = arith.mulf %405, %408 : vector<8x32xf32>
    %410 = arith.mulf %404, %406 : vector<8x32xf32>
    %411 = arith.addf %409, %410 : vector<8x32xf32>
    %412 = math.tanh %411 : vector<8x32xf32>
    %413 = arith.mulf %407, %412 : vector<8x32xf32>
    %c0_229 = arith.constant 0 : index
    %c0_230 = arith.constant 0 : index
    %414 = vector.load %arg11[%c0_229, %c0_230] : memref<8x32xf32, #tpu.memory_space<vmem>>, vector<8x32xf32>
    tpu.vector_store %arg11[%c0_229, %c0_230], %411 {strides = array<i32>} : memref<8x32xf32, #tpu.memory_space<vmem>>, vector<8x32xf32>,
    %c0_231 = arith.constant 0 : index
    %c0_232 = arith.constant 0 : index
    %415 = vector.load %arg10[%c0_231, %c0_232] : memref<8x32xf32, #tpu.memory_space<vmem>>, vector<8x32xf32>
    tpu.vector_store %arg10[%c0_231, %c0_232], %413 {strides = array<i32>} : memref<8x32xf32, #tpu.memory_space<vmem>>, vector<8x32xf32>,
    %c5_i32_233 = arith.constant 5 : i32
    %416 = arith.index_cast %c5_i32_233 : i32 to index
    %c0_234 = arith.constant 0 : index
    %c0_235 = arith.constant 0 : index
    %417 = vector.load %arg8[%416, %c0_234, %c0_235] : memref<8x8x128xf32, #tpu.memory_space<vmem>>, vector<1x8x128xf32>
    %418 = vector.shape_cast %417 : vector<1x8x128xf32> to vector<8x128xf32>
    %c0_236 = arith.constant 0 : index
    %c0_237 = arith.constant 0 : index
    %419 = vector.load %arg10[%c0_236, %c0_237] : memref<8x32xf32, #tpu.memory_space<vmem>>, vector<8x32xf32>
    %420 = arith.truncf %419 : vector<8x32xf32> to vector<8x32xbf16>
    %cst_238 = arith.constant dense<0.000000e+00> : vector<8x128xf32>
    %421 = tpu.matmul %420, %281, %cst_238 {dimension_numbers = #tpu.dot_dimension_numbers<[1], [0], [0], [1], [0, 0, 1, 1], [], []>} : vector<8x32xbf16>, vector<32x128xbf16>, vector<8x128xf32> -> vector<8x128xf32>
    %422 = arith.addf %418, %421 : vector<8x128xf32>
    %423 = arith.mulf %422, %8 : vector<8x128xf32>
    %424 = math.tanh %423 : vector<8x128xf32>
    %cst_239 = arith.constant 1.000000e+00 : f32
    %425 = vector.broadcast %cst_239 : f32 to vector<8x128xf32>
    %426 = arith.addf %424, %425 : vector<8x128xf32>
    %cst_240 = arith.constant 5.000000e-01 : f32
    %427 = vector.broadcast %cst_240 : f32 to vector<8x128xf32>
    %428 = arith.mulf %427, %426 : vector<8x128xf32>
    %429 = arith.select %5, %424, %428 : vector<8x128xi1>, vector<8x128xf32>
    %430 = vector.extract_strided_slice %429 {offsets = [0, 0], sizes = [8, 32], strides = [1, 1]} : vector<8x128xf32> to vector<8x32xf32>
    %431 = vector.extract_strided_slice %429 {offsets = [0, 32], sizes = [8, 32], strides = [1, 1]} : vector<8x128xf32> to vector<8x32xf32>
    %432 = vector.extract_strided_slice %429 {offsets = [0, 64], sizes = [8, 32], strides = [1, 1]} : vector<8x128xf32> to vector<8x32xf32>
    %433 = vector.extract_strided_slice %429 {offsets = [0, 96], sizes = [8, 32], strides = [1, 1]} : vector<8x128xf32> to vector<8x32xf32>
    %c0_241 = arith.constant 0 : index
    %c0_242 = arith.constant 0 : index
    %434 = vector.load %arg11[%c0_241, %c0_242] : memref<8x32xf32, #tpu.memory_space<vmem>>, vector<8x32xf32>
    %435 = arith.mulf %431, %434 : vector<8x32xf32>
    %436 = arith.mulf %430, %432 : vector<8x32xf32>
    %437 = arith.addf %435, %436 : vector<8x32xf32>
    %438 = math.tanh %437 : vector<8x32xf32>
    %439 = arith.mulf %433, %438 : vector<8x32xf32>
    %c0_243 = arith.constant 0 : index
    %c0_244 = arith.constant 0 : index
    %440 = vector.load %arg11[%c0_243, %c0_244] : memref<8x32xf32, #tpu.memory_space<vmem>>, vector<8x32xf32>
    tpu.vector_store %arg11[%c0_243, %c0_244], %437 {strides = array<i32>} : memref<8x32xf32, #tpu.memory_space<vmem>>, vector<8x32xf32>,
    %c0_245 = arith.constant 0 : index
    %c0_246 = arith.constant 0 : index
    %441 = vector.load %arg10[%c0_245, %c0_246] : memref<8x32xf32, #tpu.memory_space<vmem>>, vector<8x32xf32>
    tpu.vector_store %arg10[%c0_245, %c0_246], %439 {strides = array<i32>} : memref<8x32xf32, #tpu.memory_space<vmem>>, vector<8x32xf32>,
    %c6_i32_247 = arith.constant 6 : i32
    %442 = arith.index_cast %c6_i32_247 : i32 to index
    %c0_248 = arith.constant 0 : index
    %c0_249 = arith.constant 0 : index
    %443 = vector.load %arg8[%442, %c0_248, %c0_249] : memref<8x8x128xf32, #tpu.memory_space<vmem>>, vector<1x8x128xf32>
    %444 = vector.shape_cast %443 : vector<1x8x128xf32> to vector<8x128xf32>
    %c0_250 = arith.constant 0 : index
    %c0_251 = arith.constant 0 : index
    %445 = vector.load %arg10[%c0_250, %c0_251] : memref<8x32xf32, #tpu.memory_space<vmem>>, vector<8x32xf32>
    %446 = arith.truncf %445 : vector<8x32xf32> to vector<8x32xbf16>
    %cst_252 = arith.constant dense<0.000000e+00> : vector<8x128xf32>
    %447 = tpu.matmul %446, %281, %cst_252 {dimension_numbers = #tpu.dot_dimension_numbers<[1], [0], [0], [1], [0, 0, 1, 1], [], []>} : vector<8x32xbf16>, vector<32x128xbf16>, vector<8x128xf32> -> vector<8x128xf32>
    %448 = arith.addf %444, %447 : vector<8x128xf32>
    %449 = arith.mulf %448, %8 : vector<8x128xf32>
    %450 = math.tanh %449 : vector<8x128xf32>
    %cst_253 = arith.constant 1.000000e+00 : f32
    %451 = vector.broadcast %cst_253 : f32 to vector<8x128xf32>
    %452 = arith.addf %450, %451 : vector<8x128xf32>
    %cst_254 = arith.constant 5.000000e-01 : f32
    %453 = vector.broadcast %cst_254 : f32 to vector<8x128xf32>
    %454 = arith.mulf %453, %452 : vector<8x128xf32>
    %455 = arith.select %5, %450, %454 : vector<8x128xi1>, vector<8x128xf32>
    %456 = vector.extract_strided_slice %455 {offsets = [0, 0], sizes = [8, 32], strides = [1, 1]} : vector<8x128xf32> to vector<8x32xf32>
    %457 = vector.extract_strided_slice %455 {offsets = [0, 32], sizes = [8, 32], strides = [1, 1]} : vector<8x128xf32> to vector<8x32xf32>
    %458 = vector.extract_strided_slice %455 {offsets = [0, 64], sizes = [8, 32], strides = [1, 1]} : vector<8x128xf32> to vector<8x32xf32>
    %459 = vector.extract_strided_slice %455 {offsets = [0, 96], sizes = [8, 32], strides = [1, 1]} : vector<8x128xf32> to vector<8x32xf32>
    %c0_255 = arith.constant 0 : index
    %c0_256 = arith.constant 0 : index
    %460 = vector.load %arg11[%c0_255, %c0_256] : memref<8x32xf32, #tpu.memory_space<vmem>>, vector<8x32xf32>
    %461 = arith.mulf %457, %460 : vector<8x32xf32>
    %462 = arith.mulf %456, %458 : vector<8x32xf32>
    %463 = arith.addf %461, %462 : vector<8x32xf32>
    %464 = math.tanh %463 : vector<8x32xf32>
    %465 = arith.mulf %459, %464 : vector<8x32xf32>
    %c0_257 = arith.constant 0 : index
    %c0_258 = arith.constant 0 : index
    %466 = vector.load %arg11[%c0_257, %c0_258] : memref<8x32xf32, #tpu.memory_space<vmem>>, vector<8x32xf32>
    tpu.vector_store %arg11[%c0_257, %c0_258], %463 {strides = array<i32>} : memref<8x32xf32, #tpu.memory_space<vmem>>, vector<8x32xf32>,
    %c0_259 = arith.constant 0 : index
    %c0_260 = arith.constant 0 : index
    %467 = vector.load %arg10[%c0_259, %c0_260] : memref<8x32xf32, #tpu.memory_space<vmem>>, vector<8x32xf32>
    tpu.vector_store %arg10[%c0_259, %c0_260], %465 {strides = array<i32>} : memref<8x32xf32, #tpu.memory_space<vmem>>, vector<8x32xf32>,
    %c7_i32_261 = arith.constant 7 : i32
    %468 = arith.index_cast %c7_i32_261 : i32 to index
    %c0_262 = arith.constant 0 : index
    %c0_263 = arith.constant 0 : index
    %469 = vector.load %arg8[%468, %c0_262, %c0_263] : memref<8x8x128xf32, #tpu.memory_space<vmem>>, vector<1x8x128xf32>
    %470 = vector.shape_cast %469 : vector<1x8x128xf32> to vector<8x128xf32>
    %c0_264 = arith.constant 0 : index
    %c0_265 = arith.constant 0 : index
    %471 = vector.load %arg10[%c0_264, %c0_265] : memref<8x32xf32, #tpu.memory_space<vmem>>, vector<8x32xf32>
    %472 = arith.truncf %471 : vector<8x32xf32> to vector<8x32xbf16>
    %cst_266 = arith.constant dense<0.000000e+00> : vector<8x128xf32>
    %473 = tpu.matmul %472, %281, %cst_266 {dimension_numbers = #tpu.dot_dimension_numbers<[1], [0], [0], [1], [0, 0, 1, 1], [], []>} : vector<8x32xbf16>, vector<32x128xbf16>, vector<8x128xf32> -> vector<8x128xf32>
    %474 = arith.addf %470, %473 : vector<8x128xf32>
    %475 = arith.mulf %474, %8 : vector<8x128xf32>
    %476 = math.tanh %475 : vector<8x128xf32>
    %cst_267 = arith.constant 1.000000e+00 : f32
    %477 = vector.broadcast %cst_267 : f32 to vector<8x128xf32>
    %478 = arith.addf %476, %477 : vector<8x128xf32>
    %cst_268 = arith.constant 5.000000e-01 : f32
    %479 = vector.broadcast %cst_268 : f32 to vector<8x128xf32>
    %480 = arith.mulf %479, %478 : vector<8x128xf32>
    %481 = arith.select %5, %476, %480 : vector<8x128xi1>, vector<8x128xf32>
    %482 = vector.extract_strided_slice %481 {offsets = [0, 0], sizes = [8, 32], strides = [1, 1]} : vector<8x128xf32> to vector<8x32xf32>
    %483 = vector.extract_strided_slice %481 {offsets = [0, 32], sizes = [8, 32], strides = [1, 1]} : vector<8x128xf32> to vector<8x32xf32>
    %484 = vector.extract_strided_slice %481 {offsets = [0, 64], sizes = [8, 32], strides = [1, 1]} : vector<8x128xf32> to vector<8x32xf32>
    %485 = vector.extract_strided_slice %481 {offsets = [0, 96], sizes = [8, 32], strides = [1, 1]} : vector<8x128xf32> to vector<8x32xf32>
    %c0_269 = arith.constant 0 : index
    %c0_270 = arith.constant 0 : index
    %486 = vector.load %arg11[%c0_269, %c0_270] : memref<8x32xf32, #tpu.memory_space<vmem>>, vector<8x32xf32>
    %487 = arith.mulf %483, %486 : vector<8x32xf32>
    %488 = arith.mulf %482, %484 : vector<8x32xf32>
    %489 = arith.addf %487, %488 : vector<8x32xf32>
    %490 = math.tanh %489 : vector<8x32xf32>
    %491 = arith.mulf %485, %490 : vector<8x32xf32>
    %c0_271 = arith.constant 0 : index
    %c0_272 = arith.constant 0 : index
    %492 = vector.load %arg11[%c0_271, %c0_272] : memref<8x32xf32, #tpu.memory_space<vmem>>, vector<8x32xf32>
    tpu.vector_store %arg11[%c0_271, %c0_272], %489 {strides = array<i32>} : memref<8x32xf32, #tpu.memory_space<vmem>>, vector<8x32xf32>,
    %c0_273 = arith.constant 0 : index
    %c0_274 = arith.constant 0 : index
    %493 = vector.load %arg10[%c0_273, %c0_274] : memref<8x32xf32, #tpu.memory_space<vmem>>, vector<8x32xf32>
    tpu.vector_store %arg10[%c0_273, %c0_274], %491 {strides = array<i32>} : memref<8x32xf32, #tpu.memory_space<vmem>>, vector<8x32xf32>,
    %c8_i32_275 = arith.constant 8 : i32
    %c0_276 = arith.constant 0 : index
    %c0_277 = arith.constant 0 : index
    %494 = vector.load %arg10[%c0_276, %c0_277] : memref<8x32xf32, #tpu.memory_space<vmem>>, vector<8x32xf32>
    %495 = arith.truncf %494 : vector<8x32xf32> to vector<8x32xbf16>
    %c0_278 = arith.constant 0 : index
    %c0_279 = arith.constant 0 : index
    %496 = vector.load %arg5[%c0_278, %c0_279] : memref<32x128xbf16, #tpu.memory_space<vmem>>, vector<32x128xbf16>
    %cst_280 = arith.constant dense<0.000000e+00> : vector<8x128xf32>
    %497 = tpu.matmul %495, %496, %cst_280 {dimension_numbers = #tpu.dot_dimension_numbers<[1], [0], [0], [1], [0, 0, 1, 1], [], []>} : vector<8x32xbf16>, vector<32x128xbf16>, vector<8x128xf32> -> vector<8x128xf32>
    %c0_281 = arith.constant 0 : index
    %c0_282 = arith.constant 0 : index
    %498 = vector.load %arg6[%c0_281, %c0_282] : memref<1x128xf32, #tpu.memory_space<vmem>>, vector<1x128xf32>
    %499 = vector.broadcast %498 : vector<1x128xf32> to vector<8x128xf32>
    %500 = arith.addf %497, %499 : vector<8x128xf32>
    %501 = arith.negf %500 : vector<8x128xf32>
    %502 = math.exp %501 : vector<8x128xf32>
    %cst_283 = arith.constant 1.000000e+00 : f32
    %503 = vector.broadcast %cst_283 : f32 to vector<8x128xf32>
    %504 = arith.addf %503, %502 : vector<8x128xf32>
    %505 = arith.divf %503, %504 : vector<8x128xf32>
    %c0_284 = arith.constant 0 : index
    %c0_285 = arith.constant 0 : index
    %506 = vector.load %arg7[%c0_284, %c0_285] : memref<8x128xf32, #tpu.memory_space<vmem>>, vector<8x128xf32>
    tpu.vector_store %arg7[%c0_284, %c0_285], %505 {strides = array<i32>} : memref<8x128xf32, #tpu.memory_space<vmem>>, vector<8x128xf32>,
    return
  }
  func.func @transform_0(%arg0: i32) -> (i32, i32, i32) {
    %c0_i32 = arith.constant 0 : i32
    %c0_i32_0 = arith.constant 0 : i32
    %c0_i32_1 = arith.constant 0 : i32
    return %c0_i32, %arg0, %c0_i32_0 : i32, i32, i32
  }
  func.func @transform_1(%arg0: i32) -> (i32, i32, i32) {
    %c0_i32 = arith.constant 0 : i32
    %c0_i32_0 = arith.constant 0 : i32
    %c0_i32_1 = arith.constant 0 : i32
    %c0_i32_2 = arith.constant 0 : i32
    return %c0_i32, %c0_i32_0, %c0_i32_1 : i32, i32, i32
  }
  func.func @transform_2(%arg0: i32) -> (i32, i32, i32) {
    %c0_i32 = arith.constant 0 : i32
    %c0_i32_0 = arith.constant 0 : i32
    %c0_i32_1 = arith.constant 0 : i32
    %c0_i32_2 = arith.constant 0 : i32
    return %c0_i32, %c0_i32_0, %c0_i32_1 : i32, i32, i32
  }
  func.func @transform_3(%arg0: i32) -> (i32, i32, i32) {
    %c0_i32 = arith.constant 0 : i32
    %c0_i32_0 = arith.constant 0 : i32
    %c0_i32_1 = arith.constant 0 : i32
    %c0_i32_2 = arith.constant 0 : i32
    return %c0_i32, %c0_i32_0, %c0_i32_1 : i32, i32, i32
  }
  func.func @transform_4(%arg0: i32) -> (i32, i32) {
    %c0_i32 = arith.constant 0 : i32
    %c0_i32_0 = arith.constant 0 : i32
    %c0_i32_1 = arith.constant 0 : i32
    return %c0_i32, %c0_i32_0 : i32, i32
  }
  func.func @transform_5(%arg0: i32) -> (i32, i32) {
    %c0_i32 = arith.constant 0 : i32
    %c0_i32_0 = arith.constant 0 : i32
    %c0_i32_1 = arith.constant 0 : i32
    return %c0_i32, %c0_i32_0 : i32, i32
  }
  func.func @transform_6(%arg0: i32) -> (i32, i32) {
    %c0_i32 = arith.constant 0 : i32
    %c0_i32_0 = arith.constant 0 : i32
    return %arg0, %c0_i32 : i32, i32
  }
}

</mosaic_0001>

<llo_original>
// kernel: sentiment_forward.1
$region0: #{sentiment_forward.1}
  #allocation0 [shape = 'u32[]', space=smem, size = 0x4, offset = 0x4, fixed_abs, tag = 'smem constant byte address 0x4 - core index']
  #allocation1 [shape = 'u32[144,128]{1,0:T(1,128)}', space=vmem, size = 0x12000, scoped, tag = 'internal scratch']
  #allocation2 [shape = 'f32[8,8,128]{2,1,0:T(8,128)}', space=vmem, size = 0x8000, scoped, tag = 'scratch operand']
  #allocation3 [shape = 'f32[8,8,32]{2,1,0:T(8,128)}', space=vmem, size = 0x8000, scoped, tag = 'scratch operand']
  #allocation4 [shape = 'f32[8,32]{1,0:T(8,128)}', space=vmem, size = 0x1000, scoped, tag = 'scratch operand']
  #allocation5 [shape = 'f32[8,32]{1,0:T(8,128)}', space=vmem, size = 0x1000, scoped, tag = 'scratch operand']
  %s0 = inlined_call_operand.vmem [shape: f32[8,8,16], index: 0, kind: input, shape index: {}]
  %s1 = inlined_call_operand.vmem [shape: bf16[2,32,128], index: 1, kind: input, shape index: {}]
  %s2 = inlined_call_operand.vmem [shape: bf16[2,32,128], index: 2, kind: input, shape index: {}]
  %s3 = inlined_call_operand.vmem [shape: f32[2,1,128], index: 3, kind: input, shape index: {}]
  %s4 = inlined_call_operand.vmem [shape: bf16[32,128], index: 4, kind: input, shape index: {}]
  %s5 = inlined_call_operand.vmem [shape: f32[1,128], index: 5, kind: input, shape index: {}]
  %s6 = inlined_call_operand.vmem [shape: f32[8,128], index: 6, kind: output, shape index: {}]
  %s7 = sld [smem:[#allocation0]]
  $region34: #{sentiment_forward.1} parent=0
    _
  %s9 = ssub.s32 1, %s7
  %s10 = scalar_select 0, %s9, %s7
  // Predicated region
  $region2: #{sentiment_forward.1} parent=0 // pred_check
    _
  $region3: #{sentiment_forward.1} parent=0 // pred_check_branch
    %12 = sbr.rel (0) target = $region5
  $region4: #{sentiment_forward.1} parent=0 // pred_region
    _
  $region5: #{sentiment_forward.1} parent=0 // pred_fallthru
    _
  // Predicated region
  $region6: #{sentiment_forward.1} parent=0 // pred_check
    _
  $region7: #{sentiment_forward.1} parent=0 // pred_check_branch
    %14 = sbr.rel (0) target = $region9
  $region8: #{sentiment_forward.1} parent=0 // pred_region
    _
  $region9: #{sentiment_forward.1} parent=0 // pred_fallthru
    _
  // Predicated region
  $region10: #{sentiment_forward.1} parent=0 // pred_check
    _
  $region11: #{sentiment_forward.1} parent=0 // pred_check_branch
    %16 = sbr.rel (0) target = $region13
  $region12: #{sentiment_forward.1} parent=0 // pred_region
    _
  $region13: #{sentiment_forward.1} parent=0 // pred_fallthru
    _
  // Predicated region
  $region14: #{sentiment_forward.1} parent=0 // pred_check
    _
  $region15: #{sentiment_forward.1} parent=0 // pred_check_branch
    %18 = sbr.rel (0) target = $region17
  $region16: #{sentiment_forward.1} parent=0 // pred_region
    _
  $region17: #{sentiment_forward.1} parent=0 // pred_fallthru
    _
  // Predicated region
  $region18: #{sentiment_forward.1} parent=0 // pred_check
    _
  $region19: #{sentiment_forward.1} parent=0 // pred_check_branch
    %20 = sbr.rel (0) target = $region21
  $region20: #{sentiment_forward.1} parent=0 // pred_region
    _
  $region21: #{sentiment_forward.1} parent=0 // pred_fallthru
    _
  // Predicated region
  $region22: #{sentiment_forward.1} parent=0 // pred_check
    _
  $region23: #{sentiment_forward.1} parent=0 // pred_check_branch
    %22 = sbr.rel (0) target = $region25
  $region24: #{sentiment_forward.1} parent=0 // pred_region
    _
  $region25: #{sentiment_forward.1} parent=0 // pred_fallthru
    _
  %v24 = vlaneseq
  %v25 = vand.u32 %v24, 127
  %vm26 = vcmp.ge.s32.totalorder %v25, 64
  %vm27 = vcmp.lt.s32.totalorder %v25, 96
  %vm28 = vmand %vm26, %vm27
  %v29 = vsel %vm28, 1.0, 0.5
  %v30 = vld [vmem:[%s0] sm:$0xff]
  %v31 = vld [vmem:[%s0 + $0x8] sm:$0xff]
  %v32 = vld [vmem:[%s0 + $0x10] sm:$0xff]
  %v33 = vld [vmem:[%s0 + $0x18] sm:$0xff]
  %v34 = vld [vmem:[%s0 + $0x20] sm:$0xff]
  %v35 = vld [vmem:[%s0 + $0x28] sm:$0xff]
  %v36 = vld [vmem:[%s0 + $0x30] sm:$0xff]
  %v37 = vld [vmem:[%s0 + $0x38] sm:$0xff]
  %v38 = vld [vmem:[%s1] sm:$0xf]
  %v39 = vld [vmem:[%s1 + $0x4] sm:$0xf]
  %v40 = vpack.c.bf16 %v31, %v30
  %v41 = vpack.c.bf16 %v33, %v32
  %v42 = vpack.c.bf16 %v35, %v34
  %v43 = vpack.c.bf16 %v37, %v36
  %v44 = vld [vmem:[%s3] sm:$0x1]
  %v46 = vlaneseq
  %v47 = vshrl.u32 %v46, 7
  %v48 = vsub.s32 0, %v47
  %v49 = vrot.slane %v44, %v48
  %v53 = vunpack.c.l.b16 %v38
  %v54 = vunpack.c.l.b16 %v39
  %v55 = vpack.c.b16 %v54, %v53
  %vm57 = vcmask 130048
  %v59 = vsel %vm57, %v40, 0
  %v62 = vsel %vm57, %v41, 0
  %v65 = vsel %vm57, %v42, 0
  %v68 = vsel %vm57, %v43, 0
  %70 = vmatprep.subr.bf16.mxu0 0
  %71 = vmatpush1.bf16.msra.mxu0 %v55
  %72 = vmatprep.subr.bf16.mxu0 0
  %73 = vmatpush1.bf16.msra.mxu0 0
  %74 = vmatprep.subr.bf16.mxu0 0
  %75 = vmatpush1.bf16.msra.mxu0 0
  %76 = vmatprep.subr.bf16.mxu0 0
  %77 = vmatpush1.bf16.msra.mxu0 0
  %78 = vmatprep.subr.bf16.mxu0 0
  %79 = vmatpush1.bf16.msra.mxu0 0
  %80 = vmatprep.subr.bf16.mxu0 0
  %81 = vmatpush1.bf16.msra.mxu0 0
  %82 = vmatprep.subr.bf16.mxu0 0
  %83 = vmatpush1.bf16.msra.mxu0 0
  %84 = vmatprep.subr.bf16.mxu0 0
  %85 = vmatpush1.bf16.msra.mxu0 0
  %86 = vmatprep.subr.bf16.mxu0 0
  %87 = vmatpush1.bf16.msra.mxu0 0
  %88 = vmatprep.subr.bf16.mxu0 0
  %89 = vmatpush1.bf16.msra.mxu0 0
  %90 = vmatprep.subr.bf16.mxu0 0
  %91 = vmatpush1.bf16.msra.mxu0 0
  %92 = vmatprep.subr.bf16.mxu0 0
  %93 = vmatpush1.bf16.msra.mxu0 0
  %94 = vmatprep.subr.bf16.mxu0 0
  %95 = vmatpush1.bf16.msra.mxu0 0
  %96 = vmatprep.subr.bf16.mxu0 0
  %97 = vmatpush1.bf16.msra.mxu0 0
  %98 = vmatprep.subr.bf16.mxu0 0
  %99 = vmatpush1.bf16.msra.mxu0 0
  %100 = vmatprep.subr.bf16.mxu0 0
  %101 = vmatpush1.bf16.msra.mxu0 0
  %102 = vmatprep.mubr.bf16.mxu0 0
  %103 = vmatmul.mubr.bf16.gmra.mrb[0].mxu0 %v59
  %v104 = vpop.f32.mrb[0].mxu0
  %v105 = vadd.f32 %v49, %v104
  %v106 = vpop.f32.mrb[0].mxu0
  %v107 = vpop.f32.mrb[0].mxu0
  %v108 = vadd.f32 %v49, %v107
  %v109 = vpop.f32.mrb[0].mxu0
  %110 = vmatprep.mubr.bf16.mxu0 0
  %111 = vmatmul.mubr.bf16.gmra.mrb[0].mxu0 %v62
  %v112 = vpop.f32.mrb[0].mxu0
  %v113 = vadd.f32 %v49, %v112
  %v114 = vpop.f32.mrb[0].mxu0
  %v115 = vpop.f32.mrb[0].mxu0
  %v116 = vadd.f32 %v49, %v115
  %v117 = vpop.f32.mrb[0].mxu0
  %118 = vmatprep.mubr.bf16.mxu0 0
  %119 = vmatmul.mubr.bf16.gmra.mrb[0].mxu0 %v65
  %v120 = vpop.f32.mrb[0].mxu0
  %v121 = vadd.f32 %v49, %v120
  %v122 = vpop.f32.mrb[0].mxu0
  %v123 = vpop.f32.mrb[0].mxu0
  %v124 = vadd.f32 %v49, %v123
  %v125 = vpop.f32.mrb[0].mxu0
  %126 = vmatprep.mubr.bf16.mxu0 0
  %127 = vmatmul.mubr.bf16.gmra.mrb[0].mxu0 %v68
  %v128 = vpop.f32.mrb[0].mxu0
  %v129 = vadd.f32 %v49, %v128
  %v130 = vpop.f32.mrb[0].mxu0
  %v131 = vpop.f32.mrb[0].mxu0
  %v132 = vadd.f32 %v49, %v131
  %v133 = vpop.f32.mrb[0].mxu0
  %134 = vdwg.mxu0
  %135 = vst [vmem:[#allocation2] sm:$0xff] %v105
  %136 = vst [vmem:[#allocation2 + $0x8] sm:$0xff] %v108
  %137 = vst [vmem:[#allocation2 + $0x10] sm:$0xff] %v113
  %138 = vst [vmem:[#allocation2 + $0x18] sm:$0xff] %v116
  %139 = vst [vmem:[#allocation2 + $0x20] sm:$0xff] %v121
  %140 = vst [vmem:[#allocation2 + $0x28] sm:$0xff] %v124
  %141 = vst [vmem:[#allocation2 + $0x30] sm:$0xff] %v129
  %142 = vst [vmem:[#allocation2 + $0x38] sm:$0xff] %v132
  %v143 = vld [vmem:[%s2] sm:$0xf]
  %v144 = vld [vmem:[%s2 + $0x4] sm:$0xf]
  %v145 = vld [vmem:[%s2 + $0x8] sm:$0xf]
  %v146 = vld [vmem:[%s2 + $0xc] sm:$0xf]
  %vm147 = vcmask 261120
  %148 = vst.msk [vmem:[#allocation4] sm:$0xff] %vm147, 0.0
  %149 = vst.msk [vmem:[#allocation5] sm:$0xff] %vm147, 0.0
  %v150 = vld [vmem:[#allocation2] sm:$0xff]
  %v151 = vld [vmem:[#allocation4] sm:$0xff]
  %v152 = vpack.c.bf16 %v151, %v151
  %v157 = vunpack.c.l.b16 %v143
  %v158 = vunpack.c.l.b16 %v144
  %v159 = vunpack.c.l.b16 %v145
  %v160 = vunpack.c.l.b16 %v146
  %v161 = vpack.c.b16 %v158, %v157
  %v162 = vpack.c.b16 %v160, %v159
  %v166 = vsel %vm147, %v152, 0
  %168 = vmatprep.subr.bf16.mxu0 0
  %169 = vmatpush1.bf16.msra.mxu0 %v161
  %170 = vmatprep.subr.bf16.mxu0 0
  %171 = vmatpush1.bf16.msra.mxu0 %v162
  %172 = vmatprep.subr.bf16.mxu0 0
  %173 = vmatpush1.bf16.msra.mxu0 0
  %174 = vmatprep.subr.bf16.mxu0 0
  %175 = vmatpush1.bf16.msra.mxu0 0
  %176 = vmatprep.subr.bf16.mxu0 0
  %177 = vmatpush1.bf16.msra.mxu0 0
  %178 = vmatprep.subr.bf16.mxu0 0
  %179 = vmatpush1.bf16.msra.mxu0 0
  %180 = vmatprep.subr.bf16.mxu0 0
  %181 = vmatpush1.bf16.msra.mxu0 0
  %182 = vmatprep.subr.bf16.mxu0 0
  %183 = vmatpush1.bf16.msra.mxu0 0
  %184 = vmatprep.subr.bf16.mxu0 0
  %185 = vmatpush1.bf16.msra.mxu0 0
  %186 = vmatprep.subr.bf16.mxu0 0
  %187 = vmatpush1.bf16.msra.mxu0 0
  %188 = vmatprep.subr.bf16.mxu0 0
  %189 = vmatpush1.bf16.msra.mxu0 0
  %190 = vmatprep.subr.bf16.mxu0 0
  %191 = vmatpush1.bf16.msra.mxu0 0
  %192 = vmatprep.subr.bf16.mxu0 0
  %193 = vmatpush1.bf16.msra.mxu0 0
  %194 = vmatprep.subr.bf16.mxu0 0
  %195 = vmatpush1.bf16.msra.mxu0 0
  %196 = vmatprep.subr.bf16.mxu0 0
  %197 = vmatpush1.bf16.msra.mxu0 0
  %198 = vmatprep.subr.bf16.mxu0 0
  %199 = vmatpush1.bf16.msra.mxu0 0
  %200 = vmatprep.mubr.bf16.mxu0 0
  %201 = vmatmul.mubr.bf16.gmra.mrb[0].mxu0 %v166
  %v202 = vpop.f32.mrb[0].mxu0
  %v203 = vadd.f32 0.0, %v202
  %v204 = vpop.f32.mrb[0].mxu0
  %v205 = vpop.f32.mrb[0].mxu0
  %v206 = vpop.f32.mrb[0].mxu0
  %207 = vdwg.mxu0
  %v208 = vadd.f32 %v150, %v203
  %v209 = vmul.f32 %v208, %v29
  %v210 = vtanh.pop %v209
  %v211 = vadd.f32 %v210, 1.0
  %v212 = vmul.f32 %v211, 0.5
  %v213 = vsel %vm28, %v210, %v212
  %v214 = vld [vmem:[#allocation5] sm:$0xff]
  %216 = vrot.lane.b32.xlu0 %v214, 32
  %v217 = vpop.permute.xlu0 %216
  %v219 = vmul.f32 %v213, %v217
  %221 = vrot.lane.b32.xlu0 %v213, 64
  %v222 = vpop.permute.xlu0 %221
  %v224 = vmul.f32 %v213, %v222
  %226 = vrot.lane.b32.xlu0 %v224, 32
  %v227 = vpop.permute.xlu0 %226
  %v229 = vadd.f32 %v219, %v227
  %v230 = vtanh.pop %v229
  %232 = vrot.lane.b32.xlu0 %v230, 64
  %v233 = vpop.permute.xlu0 %232
  %v235 = vmul.f32 %v213, %v233
  %237 = vrot.lane.b32.xlu0 %v229, 96
  %v238 = vpop.permute.xlu0 %237
  %240 = vst.msk [vmem:[#allocation5] sm:$0xff] %vm147, %v238
  %242 = vrot.lane.b32.xlu0 %v235, 32
  %v243 = vpop.permute.xlu0 %242
  %245 = vst.msk [vmem:[#allocation4] sm:$0xff] %vm147, %v243
  %246 = vst.msk [vmem:[#allocation3] sm:$0xff] %vm147, %v243
  %s247 = scalar_lea.vmem [#allocation2], 8
  %v248 = vld [vmem:[%s247] sm:$0xff]
  %v249 = vld [vmem:[#allocation4] sm:$0xff]
  %v250 = vpack.c.bf16 %v249, %v249
  %v252 = vsel %vm147, %v250, 0
  %254 = vmatprep.subr.bf16.mxu0 0
  %255 = vmatpush1.bf16.msra.mxu0 %v161
  %256 = vmatprep.subr.bf16.mxu0 0
  %257 = vmatpush1.bf16.msra.mxu0 %v162
  %258 = vmatprep.subr.bf16.mxu0 0
  %259 = vmatpush1.bf16.msra.mxu0 0
  %260 = vmatprep.subr.bf16.mxu0 0
  %261 = vmatpush1.bf16.msra.mxu0 0
  %262 = vmatprep.subr.bf16.mxu0 0
  %263 = vmatpush1.bf16.msra.mxu0 0
  %264 = vmatprep.subr.bf16.mxu0 0
  %265 = vmatpush1.bf16.msra.mxu0 0
  %266 = vmatprep.subr.bf16.mxu0 0
  %267 = vmatpush1.bf16.msra.mxu0 0
  %268 = vmatprep.subr.bf16.mxu0 0
  %269 = vmatpush1.bf16.msra.mxu0 0
  %270 = vmatprep.subr.bf16.mxu0 0
  %271 = vmatpush1.bf16.msra.mxu0 0
  %272 = vmatprep.subr.bf16.mxu0 0
  %273 = vmatpush1.bf16.msra.mxu0 0
  %274 = vmatprep.subr.bf16.mxu0 0
  %275 = vmatpush1.bf16.msra.mxu0 0
  %276 = vmatprep.subr.bf16.mxu0 0
  %277 = vmatpush1.bf16.msra.mxu0 0
  %278 = vmatprep.subr.bf16.mxu0 0
  %279 = vmatpush1.bf16.msra.mxu0 0
  %280 = vmatprep.subr.bf16.mxu0 0
  %281 = vmatpush1.bf16.msra.mxu0 0
  %282 = vmatprep.subr.bf16.mxu0 0
  %283 = vmatpush1.bf16.msra.mxu0 0
  %284 = vmatprep.subr.bf16.mxu0 0
  %285 = vmatpush1.bf16.msra.mxu0 0
  %286 = vmatprep.mubr.bf16.mxu0 0
  %287 = vmatmul.mubr.bf16.gmra.mrb[0].mxu0 %v252
  %v288 = vpop.f32.mrb[0].mxu0
  %v289 = vadd.f32 0.0, %v288
  %v290 = vpop.f32.mrb[0].mxu0
  %v291 = vpop.f32.mrb[0].mxu0
  %v292 = vpop.f32.mrb[0].mxu0
  %293 = vdwg.mxu0
  %v294 = vadd.f32 %v248, %v289
  %v295 = vmul.f32 %v294, %v29
  %v296 = vtanh.pop %v295
  %v297 = vadd.f32 %v296, 1.0
  %v298 = vmul.f32 %v297, 0.5
  %v299 = vsel %vm28, %v296, %v298
  %v300 = vld [vmem:[#allocation5] sm:$0xff]
  %302 = vrot.lane.b32.xlu0 %v300, 32
  %v303 = vpop.permute.xlu0 %302
  %v305 = vmul.f32 %v299, %v303
  %307 = vrot.lane.b32.xlu0 %v299, 64
  %v308 = vpop.permute.xlu0 %307
  %v310 = vmul.f32 %v299, %v308
  %312 = vrot.lane.b32.xlu0 %v310, 32
  %v313 = vpop.permute.xlu0 %312
  %v315 = vadd.f32 %v305, %v313
  %v316 = vtanh.pop %v315
  %318 = vrot.lane.b32.xlu0 %v316, 64
  %v319 = vpop.permute.xlu0 %318
  %v321 = vmul.f32 %v299, %v319
  %323 = vrot.lane.b32.xlu0 %v315, 96
  %v324 = vpop.permute.xlu0 %323
  %326 = vst.msk [vmem:[#allocation5] sm:$0xff] %vm147, %v324
  %328 = vrot.lane.b32.xlu0 %v321, 32
  %v329 = vpop.permute.xlu0 %328
  %331 = vst.msk [vmem:[#allocation4] sm:$0xff] %vm147, %v329
  %s332 = scalar_lea.vmem [#allocation3], 8
  %333 = vst.msk [vmem:[%s332] sm:$0xff] %vm147, %v329
  %s334 = scalar_lea.vmem [#allocation2], 16
  %v335 = vld [vmem:[%s334] sm:$0xff]
  %v336 = vld [vmem:[#allocation4] sm:$0xff]
  %v337 = vpack.c.bf16 %v336, %v336
  %v339 = vsel %vm147, %v337, 0
  %341 = vmatprep.subr.bf16.mxu0 0
  %342 = vmatpush1.bf16.msra.mxu0 %v161
  %343 = vmatprep.subr.bf16.mxu0 0
  %344 = vmatpush1.bf16.msra.mxu0 %v162
  %345 = vmatprep.subr.bf16.mxu0 0
  %346 = vmatpush1.bf16.msra.mxu0 0
  %347 = vmatprep.subr.bf16.mxu0 0
  %348 = vmatpush1.bf16.msra.mxu0 0
  %349 = vmatprep.subr.bf16.mxu0 0
  %350 = vmatpush1.bf16.msra.mxu0 0
  %351 = vmatprep.subr.bf16.mxu0 0
  %352 = vmatpush1.bf16.msra.mxu0 0
  %353 = vmatprep.subr.bf16.mxu0 0
  %354 = vmatpush1.bf16.msra.mxu0 0
  %355 = vmatprep.subr.bf16.mxu0 0
  %356 = vmatpush1.bf16.msra.mxu0 0
  %357 = vmatprep.subr.bf16.mxu0 0
  %358 = vmatpush1.bf16.msra.mxu0 0
  %359 = vmatprep.subr.bf16.mxu0 0
  %360 = vmatpush1.bf16.msra.mxu0 0
  %361 = vmatprep.subr.bf16.mxu0 0
  %362 = vmatpush1.bf16.msra.mxu0 0
  %363 = vmatprep.subr.bf16.mxu0 0
  %364 = vmatpush1.bf16.msra.mxu0 0
  %365 = vmatprep.subr.bf16.mxu0 0
  %366 = vmatpush1.bf16.msra.mxu0 0
  %367 = vmatprep.subr.bf16.mxu0 0
  %368 = vmatpush1.bf16.msra.mxu0 0
  %369 = vmatprep.subr.bf16.mxu0 0
  %370 = vmatpush1.bf16.msra.mxu0 0
  %371 = vmatprep.subr.bf16.mxu0 0
  %372 = vmatpush1.bf16.msra.mxu0 0
  %373 = vmatprep.mubr.bf16.mxu0 0
  %374 = vmatmul.mubr.bf16.gmra.mrb[0].mxu0 %v339
  %v375 = vpop.f32.mrb[0].mxu0
  %v376 = vadd.f32 0.0, %v375
  %v377 = vpop.f32.mrb[0].mxu0
  %v378 = vpop.f32.mrb[0].mxu0
  %v379 = vpop.f32.mrb[0].mxu0
  %380 = vdwg.mxu0
  %v381 = vadd.f32 %v335, %v376
  %v382 = vmul.f32 %v381, %v29
  %v383 = vtanh.pop %v382
  %v384 = vadd.f32 %v383, 1.0
  %v385 = vmul.f32 %v384, 0.5
  %v386 = vsel %vm28, %v383, %v385
  %v387 = vld [vmem:[#allocation5] sm:$0xff]
  %389 = vrot.lane.b32.xlu0 %v387, 32
  %v390 = vpop.permute.xlu0 %389
  %v392 = vmul.f32 %v386, %v390
  %394 = vrot.lane.b32.xlu0 %v386, 64
  %v395 = vpop.permute.xlu0 %394
  %v397 = vmul.f32 %v386, %v395
  %399 = vrot.lane.b32.xlu0 %v397, 32
  %v400 = vpop.permute.xlu0 %399
  %v402 = vadd.f32 %v392, %v400
  %v403 = vtanh.pop %v402
  %405 = vrot.lane.b32.xlu0 %v403, 64
  %v406 = vpop.permute.xlu0 %405
  %v408 = vmul.f32 %v386, %v406
  %410 = vrot.lane.b32.xlu0 %v402, 96
  %v411 = vpop.permute.xlu0 %410
  %413 = vst.msk [vmem:[#allocation5] sm:$0xff] %vm147, %v411
  %415 = vrot.lane.b32.xlu0 %v408, 32
  %v416 = vpop.permute.xlu0 %415
  %418 = vst.msk [vmem:[#allocation4] sm:$0xff] %vm147, %v416
  %s419 = scalar_lea.vmem [#allocation3], 16
  %420 = vst.msk [vmem:[%s419] sm:$0xff] %vm147, %v416
  %s421 = scalar_lea.vmem [#allocation2], 24
  %v422 = vld [vmem:[%s421] sm:$0xff]
  %v423 = vld [vmem:[#allocation4] sm:$0xff]
  %v424 = vpack.c.bf16 %v423, %v423
  %v426 = vsel %vm147, %v424, 0
  %428 = vmatprep.subr.bf16.mxu0 0
  %429 = vmatpush1.bf16.msra.mxu0 %v161
  %430 = vmatprep.subr.bf16.mxu0 0
  %431 = vmatpush1.bf16.msra.mxu0 %v162
  %432 = vmatprep.subr.bf16.mxu0 0
  %433 = vmatpush1.bf16.msra.mxu0 0
  %434 = vmatprep.subr.bf16.mxu0 0
  %435 = vmatpush1.bf16.msra.mxu0 0
  %436 = vmatprep.subr.bf16.mxu0 0
  %437 = vmatpush1.bf16.msra.mxu0 0
  %438 = vmatprep.subr.bf16.mxu0 0
  %439 = vmatpush1.bf16.msra.mxu0 0
  %440 = vmatprep.subr.bf16.mxu0 0
  %441 = vmatpush1.bf16.msra.mxu0 0
  %442 = vmatprep.subr.bf16.mxu0 0
  %443 = vmatpush1.bf16.msra.mxu0 0
  %444 = vmatprep.subr.bf16.mxu0 0
  %445 = vmatpush1.bf16.msra.mxu0 0
  %446 = vmatprep.subr.bf16.mxu0 0
  %447 = vmatpush1.bf16.msra.mxu0 0
  %448 = vmatprep.subr.bf16.mxu0 0
  %449 = vmatpush1.bf16.msra.mxu0 0
  %450 = vmatprep.subr.bf16.mxu0 0
  %451 = vmatpush1.bf16.msra.mxu0 0
  %452 = vmatprep.subr.bf16.mxu0 0
  %453 = vmatpush1.bf16.msra.mxu0 0
  %454 = vmatprep.subr.bf16.mxu0 0
  %455 = vmatpush1.bf16.msra.mxu0 0
  %456 = vmatprep.subr.bf16.mxu0 0
  %457 = vmatpush1.bf16.msra.mxu0 0
  %458 = vmatprep.subr.bf16.mxu0 0
  %459 = vmatpush1.bf16.msra.mxu0 0
  %460 = vmatprep.mubr.bf16.mxu0 0
  %461 = vmatmul.mubr.bf16.gmra.mrb[0].mxu0 %v426
  %v462 = vpop.f32.mrb[0].mxu0
  %v463 = vadd.f32 0.0, %v462
  %v464 = vpop.f32.mrb[0].mxu0
  %v465 = vpop.f32.mrb[0].mxu0
  %v466 = vpop.f32.mrb[0].mxu0
  %467 = vdwg.mxu0
  %v468 = vadd.f32 %v422, %v463
  %v469 = vmul.f32 %v468, %v29
  %v470 = vtanh.pop %v469
  %v471 = vadd.f32 %v470, 1.0
  %v472 = vmul.f32 %v471, 0.5
  %v473 = vsel %vm28, %v470, %v472
  %v474 = vld [vmem:[#allocation5] sm:$0xff]
  %476 = vrot.lane.b32.xlu0 %v474, 32
  %v477 = vpop.permute.xlu0 %476
  %v479 = vmul.f32 %v473, %v477
  %481 = vrot.lane.b32.xlu0 %v473, 64
  %v482 = vpop.permute.xlu0 %481
  %v484 = vmul.f32 %v473, %v482
  %486 = vrot.lane.b32.xlu0 %v484, 32
  %v487 = vpop.permute.xlu0 %486
  %v489 = vadd.f32 %v479, %v487
  %v490 = vtanh.pop %v489
  %492 = vrot.lane.b32.xlu0 %v490, 64
  %v493 = vpop.permute.xlu0 %492
  %v495 = vmul.f32 %v473, %v493
  %497 = vrot.lane.b32.xlu0 %v489, 96
  %v498 = vpop.permute.xlu0 %497
  %500 = vst.msk [vmem:[#allocation5] sm:$0xff] %vm147, %v498
  %502 = vrot.lane.b32.xlu0 %v495, 32
  %v503 = vpop.permute.xlu0 %502
  %505 = vst.msk [vmem:[#allocation4] sm:$0xff] %vm147, %v503
  %s506 = scalar_lea.vmem [#allocation3], 24
  %507 = vst.msk [vmem:[%s506] sm:$0xff] %vm147, %v503
  %s508 = scalar_lea.vmem [#allocation2], 32
  %v509 = vld [vmem:[%s508] sm:$0xff]
  %v510 = vld [vmem:[#allocation4] sm:$0xff]
  %v511 = vpack.c.bf16 %v510, %v510
  %v513 = vsel %vm147, %v511, 0
  %515 = vmatprep.subr.bf16.mxu0 0
  %516 = vmatpush1.bf16.msra.mxu0 %v161
  %517 = vmatprep.subr.bf16.mxu0 0
  %518 = vmatpush1.bf16.msra.mxu0 %v162
  %519 = vmatprep.subr.bf16.mxu0 0
  %520 = vmatpush1.bf16.msra.mxu0 0
  %521 = vmatprep.subr.bf16.mxu0 0
  %522 = vmatpush1.bf16.msra.mxu0 0
  %523 = vmatprep.subr.bf16.mxu0 0
  %524 = vmatpush1.bf16.msra.mxu0 0
  %525 = vmatprep.subr.bf16.mxu0 0
  %526 = vmatpush1.bf16.msra.mxu0 0
  %527 = vmatprep.subr.bf16.mxu0 0
  %528 = vmatpush1.bf16.msra.mxu0 0
  %529 = vmatprep.subr.bf16.mxu0 0
  %530 = vmatpush1.bf16.msra.mxu0 0
  %531 = vmatprep.subr.bf16.mxu0 0
  %532 = vmatpush1.bf16.msra.mxu0 0
  %533 = vmatprep.subr.bf16.mxu0 0
  %534 = vmatpush1.bf16.msra.mxu0 0
  %535 = vmatprep.subr.bf16.mxu0 0
  %536 = vmatpush1.bf16.msra.mxu0 0
  %537 = vmatprep.subr.bf16.mxu0 0
  %538 = vmatpush1.bf16.msra.mxu0 0
  %539 = vmatprep.subr.bf16.mxu0 0
  %540 = vmatpush1.bf16.msra.mxu0 0
  %541 = vmatprep.subr.bf16.mxu0 0
  %542 = vmatpush1.bf16.msra.mxu0 0
  %543 = vmatprep.subr.bf16.mxu0 0
  %544 = vmatpush1.bf16.msra.mxu0 0
  %545 = vmatprep.subr.bf16.mxu0 0
  %546 = vmatpush1.bf16.msra.mxu0 0
  %547 = vmatprep.mubr.bf16.mxu0 0
  %548 = vmatmul.mubr.bf16.gmra.mrb[0].mxu0 %v513
  %v549 = vpop.f32.mrb[0].mxu0
  %v550 = vadd.f32 0.0, %v549
  %v551 = vpop.f32.mrb[0].mxu0
  %v552 = vpop.f32.mrb[0].mxu0
  %v553 = vpop.f32.mrb[0].mxu0
  %554 = vdwg.mxu0
  %v555 = vadd.f32 %v509, %v550
  %v556 = vmul.f32 %v555, %v29
  %v557 = vtanh.pop %v556
  %v558 = vadd.f32 %v557, 1.0
  %v559 = vmul.f32 %v558, 0.5
  %v560 = vsel %vm28, %v557, %v559
  %v561 = vld [vmem:[#allocation5] sm:$0xff]
  %563 = vrot.lane.b32.xlu0 %v561, 32
  %v564 = vpop.permute.xlu0 %563
  %v566 = vmul.f32 %v560, %v564
  %568 = vrot.lane.b32.xlu0 %v560, 64
  %v569 = vpop.permute.xlu0 %568
  %v571 = vmul.f32 %v560, %v569
  %573 = vrot.lane.b32.xlu0 %v571, 32
  %v574 = vpop.permute.xlu0 %573
  %v576 = vadd.f32 %v566, %v574
  %v577 = vtanh.pop %v576
  %579 = vrot.lane.b32.xlu0 %v577, 64
  %v580 = vpop.permute.xlu0 %579
  %v582 = vmul.f32 %v560, %v580
  %584 = vrot.lane.b32.xlu0 %v576, 96
  %v585 = vpop.permute.xlu0 %584
  %587 = vst.msk [vmem:[#allocation5] sm:$0xff] %vm147, %v585
  %589 = vrot.lane.b32.xlu0 %v582, 32
  %v590 = vpop.permute.xlu0 %589
  %592 = vst.msk [vmem:[#allocation4] sm:$0xff] %vm147, %v590
  %s593 = scalar_lea.vmem [#allocation3], 32
  %594 = vst.msk [vmem:[%s593] sm:$0xff] %vm147, %v590
  %s595 = scalar_lea.vmem [#allocation2], 40
  %v596 = vld [vmem:[%s595] sm:$0xff]
  %v597 = vld [vmem:[#allocation4] sm:$0xff]
  %v598 = vpack.c.bf16 %v597, %v597
  %v600 = vsel %vm147, %v598, 0
  %602 = vmatprep.subr.bf16.mxu0 0
  %603 = vmatpush1.bf16.msra.mxu0 %v161
  %604 = vmatprep.subr.bf16.mxu0 0
  %605 = vmatpush1.bf16.msra.mxu0 %v162
  %606 = vmatprep.subr.bf16.mxu0 0
  %607 = vmatpush1.bf16.msra.mxu0 0
  %608 = vmatprep.subr.bf16.mxu0 0
  %609 = vmatpush1.bf16.msra.mxu0 0
  %610 = vmatprep.subr.bf16.mxu0 0
  %611 = vmatpush1.bf16.msra.mxu0 0
  %612 = vmatprep.subr.bf16.mxu0 0
  %613 = vmatpush1.bf16.msra.mxu0 0
  %614 = vmatprep.subr.bf16.mxu0 0
  %615 = vmatpush1.bf16.msra.mxu0 0
  %616 = vmatprep.subr.bf16.mxu0 0
  %617 = vmatpush1.bf16.msra.mxu0 0
  %618 = vmatprep.subr.bf16.mxu0 0
  %619 = vmatpush1.bf16.msra.mxu0 0
  %620 = vmatprep.subr.bf16.mxu0 0
  %621 = vmatpush1.bf16.msra.mxu0 0
  %622 = vmatprep.subr.bf16.mxu0 0
  %623 = vmatpush1.bf16.msra.mxu0 0
  %624 = vmatprep.subr.bf16.mxu0 0
  %625 = vmatpush1.bf16.msra.mxu0 0
  %626 = vmatprep.subr.bf16.mxu0 0
  %627 = vmatpush1.bf16.msra.mxu0 0
  %628 = vmatprep.subr.bf16.mxu0 0
  %629 = vmatpush1.bf16.msra.mxu0 0
  %630 = vmatprep.subr.bf16.mxu0 0
  %631 = vmatpush1.bf16.msra.mxu0 0
  %632 = vmatprep.subr.bf16.mxu0 0
  %633 = vmatpush1.bf16.msra.mxu0 0
  %634 = vmatprep.mubr.bf16.mxu0 0
  %635 = vmatmul.mubr.bf16.gmra.mrb[0].mxu0 %v600
  %v636 = vpop.f32.mrb[0].mxu0
  %v637 = vadd.f32 0.0, %v636
  %v638 = vpop.f32.mrb[0].mxu0
  %v639 = vpop.f32.mrb[0].mxu0
  %v640 = vpop.f32.mrb[0].mxu0
  %641 = vdwg.mxu0
  %v642 = vadd.f32 %v596, %v637
  %v643 = vmul.f32 %v642, %v29
  %v644 = vtanh.pop %v643
  %v645 = vadd.f32 %v644, 1.0
  %v646 = vmul.f32 %v645, 0.5
  %v647 = vsel %vm28, %v644, %v646
  %v648 = vld [vmem:[#allocation5] sm:$0xff]
  %650 = vrot.lane.b32.xlu0 %v648, 32
  %v651 = vpop.permute.xlu0 %650
  %v653 = vmul.f32 %v647, %v651
  %655 = vrot.lane.b32.xlu0 %v647, 64
  %v656 = vpop.permute.xlu0 %655
  %v658 = vmul.f32 %v647, %v656
  %660 = vrot.lane.b32.xlu0 %v658, 32
  %v661 = vpop.permute.xlu0 %660
  %v663 = vadd.f32 %v653, %v661
  %v664 = vtanh.pop %v663
  %666 = vrot.lane.b32.xlu0 %v664, 64
  %v667 = vpop.permute.xlu0 %666
  %v669 = vmul.f32 %v647, %v667
  %671 = vrot.lane.b32.xlu0 %v663, 96
  %v672 = vpop.permute.xlu0 %671
  %674 = vst.msk [vmem:[#allocation5] sm:$0xff] %vm147, %v672
  %676 = vrot.lane.b32.xlu0 %v669, 32
  %v677 = vpop.permute.xlu0 %676
  %679 = vst.msk [vmem:[#allocation4] sm:$0xff] %vm147, %v677
  %s680 = scalar_lea.vmem [#allocation3], 40
  %681 = vst.msk [vmem:[%s680] sm:$0xff] %vm147, %v677
  %s682 = scalar_lea.vmem [#allocation2], 48
  %v683 = vld [vmem:[%s682] sm:$0xff]
  %v684 = vld [vmem:[#allocation4] sm:$0xff]
  %v685 = vpack.c.bf16 %v684, %v684
  %v687 = vsel %vm147, %v685, 0
  %689 = vmatprep.subr.bf16.mxu0 0
  %690 = vmatpush1.bf16.msra.mxu0 %v161
  %691 = vmatprep.subr.bf16.mxu0 0
  %692 = vmatpush1.bf16.msra.mxu0 %v162
  %693 = vmatprep.subr.bf16.mxu0 0
  %694 = vmatpush1.bf16.msra.mxu0 0
  %695 = vmatprep.subr.bf16.mxu0 0
  %696 = vmatpush1.bf16.msra.mxu0 0
  %697 = vmatprep.subr.bf16.mxu0 0
  %698 = vmatpush1.bf16.msra.mxu0 0
  %699 = vmatprep.subr.bf16.mxu0 0
  %700 = vmatpush1.bf16.msra.mxu0 0
  %701 = vmatprep.subr.bf16.mxu0 0
  %702 = vmatpush1.bf16.msra.mxu0 0
  %703 = vmatprep.subr.bf16.mxu0 0
  %704 = vmatpush1.bf16.msra.mxu0 0
  %705 = vmatprep.subr.bf16.mxu0 0
  %706 = vmatpush1.bf16.msra.mxu0 0
  %707 = vmatprep.subr.bf16.mxu0 0
  %708 = vmatpush1.bf16.msra.mxu0 0
  %709 = vmatprep.subr.bf16.mxu0 0
  %710 = vmatpush1.bf16.msra.mxu0 0
  %711 = vmatprep.subr.bf16.mxu0 0
  %712 = vmatpush1.bf16.msra.mxu0 0
  %713 = vmatprep.subr.bf16.mxu0 0
  %714 = vmatpush1.bf16.msra.mxu0 0
  %715 = vmatprep.subr.bf16.mxu0 0
  %716 = vmatpush1.bf16.msra.mxu0 0
  %717 = vmatprep.subr.bf16.mxu0 0
  %718 = vmatpush1.bf16.msra.mxu0 0
  %719 = vmatprep.subr.bf16.mxu0 0
  %720 = vmatpush1.bf16.msra.mxu0 0
  %721 = vmatprep.mubr.bf16.mxu0 0
  %722 = vmatmul.mubr.bf16.gmra.mrb[0].mxu0 %v687
  %v723 = vpop.f32.mrb[0].mxu0
  %v724 = vadd.f32 0.0, %v723
  %v725 = vpop.f32.mrb[0].mxu0
  %v726 = vpop.f32.mrb[0].mxu0
  %v727 = vpop.f32.mrb[0].mxu0
  %728 = vdwg.mxu0
  %v729 = vadd.f32 %v683, %v724
  %v730 = vmul.f32 %v729, %v29
  %v731 = vtanh.pop %v730
  %v732 = vadd.f32 %v731, 1.0
  %v733 = vmul.f32 %v732, 0.5
  %v734 = vsel %vm28, %v731, %v733
  %v735 = vld [vmem:[#allocation5] sm:$0xff]
  %737 = vrot.lane.b32.xlu0 %v735, 32
  %v738 = vpop.permute.xlu0 %737
  %v740 = vmul.f32 %v734, %v738
  %742 = vrot.lane.b32.xlu0 %v734, 64
  %v743 = vpop.permute.xlu0 %742
  %v745 = vmul.f32 %v734, %v743
  %747 = vrot.lane.b32.xlu0 %v745, 32
  %v748 = vpop.permute.xlu0 %747
  %v750 = vadd.f32 %v740, %v748
  %v751 = vtanh.pop %v750
  %753 = vrot.lane.b32.xlu0 %v751, 64
  %v754 = vpop.permute.xlu0 %753
  %v756 = vmul.f32 %v734, %v754
  %758 = vrot.lane.b32.xlu0 %v750, 96
  %v759 = vpop.permute.xlu0 %758
  %761 = vst.msk [vmem:[#allocation5] sm:$0xff] %vm147, %v759
  %763 = vrot.lane.b32.xlu0 %v756, 32
  %v764 = vpop.permute.xlu0 %763
  %766 = vst.msk [vmem:[#allocation4] sm:$0xff] %vm147, %v764
  %s767 = scalar_lea.vmem [#allocation3], 48
  %768 = vst.msk [vmem:[%s767] sm:$0xff] %vm147, %v764
  %s769 = scalar_lea.vmem [#allocation2], 56
  %v770 = vld [vmem:[%s769] sm:$0xff]
  %v771 = vld [vmem:[#allocation4] sm:$0xff]
  %v772 = vpack.c.bf16 %v771, %v771
  %v774 = vsel %vm147, %v772, 0
  %776 = vmatprep.subr.bf16.mxu0 0
  %777 = vmatpush1.bf16.msra.mxu0 %v161
  %778 = vmatprep.subr.bf16.mxu0 0
  %779 = vmatpush1.bf16.msra.mxu0 %v162
  %780 = vmatprep.subr.bf16.mxu0 0
  %781 = vmatpush1.bf16.msra.mxu0 0
  %782 = vmatprep.subr.bf16.mxu0 0
  %783 = vmatpush1.bf16.msra.mxu0 0
  %784 = vmatprep.subr.bf16.mxu0 0
  %785 = vmatpush1.bf16.msra.mxu0 0
  %786 = vmatprep.subr.bf16.mxu0 0
  %787 = vmatpush1.bf16.msra.mxu0 0
  %788 = vmatprep.subr.bf16.mxu0 0
  %789 = vmatpush1.bf16.msra.mxu0 0
  %790 = vmatprep.subr.bf16.mxu0 0
  %791 = vmatpush1.bf16.msra.mxu0 0
  %792 = vmatprep.subr.bf16.mxu0 0
  %793 = vmatpush1.bf16.msra.mxu0 0
  %794 = vmatprep.subr.bf16.mxu0 0
  %795 = vmatpush1.bf16.msra.mxu0 0
  %796 = vmatprep.subr.bf16.mxu0 0
  %797 = vmatpush1.bf16.msra.mxu0 0
  %798 = vmatprep.subr.bf16.mxu0 0
  %799 = vmatpush1.bf16.msra.mxu0 0
  %800 = vmatprep.subr.bf16.mxu0 0
  %801 = vmatpush1.bf16.msra.mxu0 0
  %802 = vmatprep.subr.bf16.mxu0 0
  %803 = vmatpush1.bf16.msra.mxu0 0
  %804 = vmatprep.subr.bf16.mxu0 0
  %805 = vmatpush1.bf16.msra.mxu0 0
  %806 = vmatprep.subr.bf16.mxu0 0
  %807 = vmatpush1.bf16.msra.mxu0 0
  %808 = vmatprep.mubr.bf16.mxu0 0
  %809 = vmatmul.mubr.bf16.gmra.mrb[0].mxu0 %v774
  %v810 = vpop.f32.mrb[0].mxu0
  %v811 = vadd.f32 0.0, %v810
  %v812 = vpop.f32.mrb[0].mxu0
  %v813 = vpop.f32.mrb[0].mxu0
  %v814 = vpop.f32.mrb[0].mxu0
  %815 = vdwg.mxu0
  %v816 = vadd.f32 %v770, %v811
  %v817 = vmul.f32 %v816, %v29
  %v818 = vtanh.pop %v817
  %v819 = vadd.f32 %v818, 1.0
  %v820 = vmul.f32 %v819, 0.5
  %v821 = vsel %vm28, %v818, %v820
  %v822 = vld [vmem:[#allocation5] sm:$0xff]
  %824 = vrot.lane.b32.xlu0 %v822, 32
  %v825 = vpop.permute.xlu0 %824
  %v827 = vmul.f32 %v821, %v825
  %829 = vrot.lane.b32.xlu0 %v821, 64
  %v830 = vpop.permute.xlu0 %829
  %v832 = vmul.f32 %v821, %v830
  %834 = vrot.lane.b32.xlu0 %v832, 32
  %v835 = vpop.permute.xlu0 %834
  %v837 = vadd.f32 %v827, %v835
  %v838 = vtanh.pop %v837
  %840 = vrot.lane.b32.xlu0 %v838, 64
  %v841 = vpop.permute.xlu0 %840
  %v843 = vmul.f32 %v821, %v841
  %845 = vrot.lane.b32.xlu0 %v837, 96
  %v846 = vpop.permute.xlu0 %845
  %848 = vst.msk [vmem:[#allocation5] sm:$0xff] %vm147, %v846
  %850 = vrot.lane.b32.xlu0 %v843, 32
  %v851 = vpop.permute.xlu0 %850
  %853 = vst.msk [vmem:[#allocation4] sm:$0xff] %vm147, %v851
  %s854 = scalar_lea.vmem [#allocation3], 56
  %855 = vst.msk [vmem:[%s854] sm:$0xff] %vm147, %v851
  %v856 = vld [vmem:[#allocation3] sm:$0xff]
  %v857 = vld [vmem:[#allocation3 + $0x8] sm:$0xff]
  %v858 = vld [vmem:[#allocation3 + $0x10] sm:$0xff]
  %v859 = vld [vmem:[#allocation3 + $0x18] sm:$0xff]
  %v860 = vld [vmem:[#allocation3 + $0x20] sm:$0xff]
  %v861 = vld [vmem:[#allocation3 + $0x28] sm:$0xff]
  %v862 = vld [vmem:[#allocation3 + $0x30] sm:$0xff]
  %v863 = vld [vmem:[#allocation3 + $0x38] sm:$0xff]
  %s864 = scalar_lea.vmem %s1, 16
  %v865 = vld [vmem:[%s864] sm:$0xf]
  %v866 = vld [vmem:[%s864 + $0x4] sm:$0xf]
  %v867 = vld [vmem:[%s864 + $0x8] sm:$0xf]
  %v868 = vld [vmem:[%s864 + $0xc] sm:$0xf]
  %v869 = vpack.c.bf16 %v857, %v856
  %v870 = vpack.c.bf16 %v859, %v858
  %v871 = vpack.c.bf16 %v861, %v860
  %v872 = vpack.c.bf16 %v863, %v862
  %s873 = scalar_lea.vmem %s3, 1
  %v874 = vld [vmem:[%s873] sm:$0x1]
  %v876 = vlaneseq
  %v877 = vshrl.u32 %v876, 7
  %v878 = vsub.s32 0, %v877
  %v879 = vrot.slane %v874, %v878
  %v885 = vunpack.c.l.b16 %v865
  %v886 = vunpack.c.l.b16 %v866
  %v887 = vunpack.c.l.b16 %v867
  %v888 = vunpack.c.l.b16 %v868
  %v889 = vpack.c.b16 %v886, %v885
  %v890 = vpack.c.b16 %v888, %v887
  %v894 = vsel %vm147, %v869, 0
  %v897 = vsel %vm147, %v870, 0
  %v900 = vsel %vm147, %v871, 0
  %v903 = vsel %vm147, %v872, 0
  %905 = vmatprep.subr.bf16.mxu0 0
  %906 = vmatpush1.bf16.msra.mxu0 %v889
  %907 = vmatprep.subr.bf16.mxu0 0
  %908 = vmatpush1.bf16.msra.mxu0 %v890
  %909 = vmatprep.subr.bf16.mxu0 0
  %910 = vmatpush1.bf16.msra.mxu0 0
  %911 = vmatprep.subr.bf16.mxu0 0
  %912 = vmatpush1.bf16.msra.mxu0 0
  %913 = vmatprep.subr.bf16.mxu0 0
  %914 = vmatpush1.bf16.msra.mxu0 0
  %915 = vmatprep.subr.bf16.mxu0 0
  %916 = vmatpush1.bf16.msra.mxu0 0
  %917 = vmatprep.subr.bf16.mxu0 0
  %918 = vmatpush1.bf16.msra.mxu0 0
  %919 = vmatprep.subr.bf16.mxu0 0
  %920 = vmatpush1.bf16.msra.mxu0 0
  %921 = vmatprep.subr.bf16.mxu0 0
  %922 = vmatpush1.bf16.msra.mxu0 0
  %923 = vmatprep.subr.bf16.mxu0 0
  %924 = vmatpush1.bf16.msra.mxu0 0
  %925 = vmatprep.subr.bf16.mxu0 0
  %926 = vmatpush1.bf16.msra.mxu0 0
  %927 = vmatprep.subr.bf16.mxu0 0
  %928 = vmatpush1.bf16.msra.mxu0 0
  %929 = vmatprep.subr.bf16.mxu0 0
  %930 = vmatpush1.bf16.msra.mxu0 0
  %931 = vmatprep.subr.bf16.mxu0 0
  %932 = vmatpush1.bf16.msra.mxu0 0
  %933 = vmatprep.subr.bf16.mxu0 0
  %934 = vmatpush1.bf16.msra.mxu0 0
  %935 = vmatprep.subr.bf16.mxu0 0
  %936 = vmatpush1.bf16.msra.mxu0 0
  %937 = vmatprep.mubr.bf16.mxu0 0
  %938 = vmatmul.mubr.bf16.gmra.mrb[0].mxu0 %v894
  %v939 = vpop.f32.mrb[0].mxu0
  %v940 = vadd.f32 %v879, %v939
  %v941 = vpop.f32.mrb[0].mxu0
  %v942 = vpop.f32.mrb[0].mxu0
  %v943 = vadd.f32 %v879, %v942
  %v944 = vpop.f32.mrb[0].mxu0
  %945 = vmatprep.mubr.bf16.mxu0 0
  %946 = vmatmul.mubr.bf16.gmra.mrb[0].mxu0 %v897
  %v947 = vpop.f32.mrb[0].mxu0
  %v948 = vadd.f32 %v879, %v947
  %v949 = vpop.f32.mrb[0].mxu0
  %v950 = vpop.f32.mrb[0].mxu0
  %v951 = vadd.f32 %v879, %v950
  %v952 = vpop.f32.mrb[0].mxu0
  %953 = vmatprep.mubr.bf16.mxu0 0
  %954 = vmatmul.mubr.bf16.gmra.mrb[0].mxu0 %v900
  %v955 = vpop.f32.mrb[0].mxu0
  %v956 = vadd.f32 %v879, %v955
  %v957 = vpop.f32.mrb[0].mxu0
  %v958 = vpop.f32.mrb[0].mxu0
  %v959 = vadd.f32 %v879, %v958
  %v960 = vpop.f32.mrb[0].mxu0
  %961 = vmatprep.mubr.bf16.mxu0 0
  %962 = vmatmul.mubr.bf16.gmra.mrb[0].mxu0 %v903
  %v963 = vpop.f32.mrb[0].mxu0
  %v964 = vadd.f32 %v879, %v963
  %v965 = vpop.f32.mrb[0].mxu0
  %v966 = vpop.f32.mrb[0].mxu0
  %v967 = vadd.f32 %v879, %v966
  %v968 = vpop.f32.mrb[0].mxu0
  %969 = vdwg.mxu0
  %970 = vst [vmem:[#allocation2] sm:$0xff] %v940
  %971 = vst [vmem:[#allocation2 + $0x8] sm:$0xff] %v943
  %972 = vst [vmem:[#allocation2 + $0x10] sm:$0xff] %v948
  %973 = vst [vmem:[#allocation2 + $0x18] sm:$0xff] %v951
  %974 = vst [vmem:[#allocation2 + $0x20] sm:$0xff] %v956
  %975 = vst [vmem:[#allocation2 + $0x28] sm:$0xff] %v959
  %976 = vst [vmem:[#allocation2 + $0x30] sm:$0xff] %v964
  %977 = vst [vmem:[#allocation2 + $0x38] sm:$0xff] %v967
  %s978 = scalar_lea.vmem %s2, 16
  %v979 = vld [vmem:[%s978] sm:$0xf]
  %v980 = vld [vmem:[%s978 + $0x4] sm:$0xf]
  %v981 = vld [vmem:[%s978 + $0x8] sm:$0xf]
  %v982 = vld [vmem:[%s978 + $0xc] sm:$0xf]
  %983 = vst.msk [vmem:[#allocation4] sm:$0xff] %vm147, 0.0
  %984 = vst.msk [vmem:[#allocation5] sm:$0xff] %vm147, 0.0
  %v985 = vld [vmem:[#allocation2] sm:$0xff]
  %v986 = vld [vmem:[#allocation4] sm:$0xff]
  %v987 = vpack.c.bf16 %v986, %v986
  %v992 = vunpack.c.l.b16 %v979
  %v993 = vunpack.c.l.b16 %v980
  %v994 = vunpack.c.l.b16 %v981
  %v995 = vunpack.c.l.b16 %v982
  %v996 = vpack.c.b16 %v993, %v992
  %v997 = vpack.c.b16 %v995, %v994
  %v1001 = vsel %vm147, %v987, 0
  %1003 = vmatprep.subr.bf16.mxu0 0
  %1004 = vmatpush1.bf16.msra.mxu0 %v996
  %1005 = vmatprep.subr.bf16.mxu0 0
  %1006 = vmatpush1.bf16.msra.mxu0 %v997
  %1007 = vmatprep.subr.bf16.mxu0 0
  %1008 = vmatpush1.bf16.msra.mxu0 0
  %1009 = vmatprep.subr.bf16.mxu0 0
  %1010 = vmatpush1.bf16.msra.mxu0 0
  %1011 = vmatprep.subr.bf16.mxu0 0
  %1012 = vmatpush1.bf16.msra.mxu0 0
  %1013 = vmatprep.subr.bf16.mxu0 0
  %1014 = vmatpush1.bf16.msra.mxu0 0
  %1015 = vmatprep.subr.bf16.mxu0 0
  %1016 = vmatpush1.bf16.msra.mxu0 0
  %1017 = vmatprep.subr.bf16.mxu0 0
  %1018 = vmatpush1.bf16.msra.mxu0 0
  %1019 = vmatprep.subr.bf16.mxu0 0
  %1020 = vmatpush1.bf16.msra.mxu0 0
  %1021 = vmatprep.subr.bf16.mxu0 0
  %1022 = vmatpush1.bf16.msra.mxu0 0
  %1023 = vmatprep.subr.bf16.mxu0 0
  %1024 = vmatpush1.bf16.msra.mxu0 0
  %1025 = vmatprep.subr.bf16.mxu0 0
  %1026 = vmatpush1.bf16.msra.mxu0 0
  %1027 = vmatprep.subr.bf16.mxu0 0
  %1028 = vmatpush1.bf16.msra.mxu0 0
  %1029 = vmatprep.subr.bf16.mxu0 0
  %1030 = vmatpush1.bf16.msra.mxu0 0
  %1031 = vmatprep.subr.bf16.mxu0 0
  %1032 = vmatpush1.bf16.msra.mxu0 0
  %1033 = vmatprep.subr.bf16.mxu0 0
  %1034 = vmatpush1.bf16.msra.mxu0 0
  %1035 = vmatprep.mubr.bf16.mxu0 0
  %1036 = vmatmul.mubr.bf16.gmra.mrb[0].mxu0 %v1001
  %v1037 = vpop.f32.mrb[0].mxu0
  %v1038 = vadd.f32 0.0, %v1037
  %v1039 = vpop.f32.mrb[0].mxu0
  %v1040 = vpop.f32.mrb[0].mxu0
  %v1041 = vpop.f32.mrb[0].mxu0
  %1042 = vdwg.mxu0
  %v1043 = vadd.f32 %v985, %v1038
  %v1044 = vmul.f32 %v1043, %v29
  %v1045 = vtanh.pop %v1044
  %v1046 = vadd.f32 %v1045, 1.0
  %v1047 = vmul.f32 %v1046, 0.5
  %v1048 = vsel %vm28, %v1045, %v1047
  %v1049 = vld [vmem:[#allocation5] sm:$0xff]
  %1051 = vrot.lane.b32.xlu0 %v1049, 32
  %v1052 = vpop.permute.xlu0 %1051
  %v1054 = vmul.f32 %v1048, %v1052
  %1056 = vrot.lane.b32.xlu0 %v1048, 64
  %v1057 = vpop.permute.xlu0 %1056
  %v1059 = vmul.f32 %v1048, %v1057
  %1061 = vrot.lane.b32.xlu0 %v1059, 32
  %v1062 = vpop.permute.xlu0 %1061
  %v1064 = vadd.f32 %v1054, %v1062
  %v1065 = vtanh.pop %v1064
  %1067 = vrot.lane.b32.xlu0 %v1065, 64
  %v1068 = vpop.permute.xlu0 %1067
  %v1070 = vmul.f32 %v1048, %v1068
  %1072 = vrot.lane.b32.xlu0 %v1064, 96
  %v1073 = vpop.permute.xlu0 %1072
  %1075 = vst.msk [vmem:[#allocation5] sm:$0xff] %vm147, %v1073
  %1077 = vrot.lane.b32.xlu0 %v1070, 32
  %v1078 = vpop.permute.xlu0 %1077
  %1080 = vst.msk [vmem:[#allocation4] sm:$0xff] %vm147, %v1078
  %v1081 = vld [vmem:[%s247] sm:$0xff]
  %v1082 = vld [vmem:[#allocation4] sm:$0xff]
  %v1083 = vpack.c.bf16 %v1082, %v1082
  %v1085 = vsel %vm147, %v1083, 0
  %1087 = vmatprep.subr.bf16.mxu0 0
  %1088 = vmatpush1.bf16.msra.mxu0 %v996
  %1089 = vmatprep.subr.bf16.mxu0 0
  %1090 = vmatpush1.bf16.msra.mxu0 %v997
  %1091 = vmatprep.subr.bf16.mxu0 0
  %1092 = vmatpush1.bf16.msra.mxu0 0
  %1093 = vmatprep.subr.bf16.mxu0 0
  %1094 = vmatpush1.bf16.msra.mxu0 0
  %1095 = vmatprep.subr.bf16.mxu0 0
  %1096 = vmatpush1.bf16.msra.mxu0 0
  %1097 = vmatprep.subr.bf16.mxu0 0
  %1098 = vmatpush1.bf16.msra.mxu0 0
  %1099 = vmatprep.subr.bf16.mxu0 0
  %1100 = vmatpush1.bf16.msra.mxu0 0
  %1101 = vmatprep.subr.bf16.mxu0 0
  %1102 = vmatpush1.bf16.msra.mxu0 0
  %1103 = vmatprep.subr.bf16.mxu0 0
  %1104 = vmatpush1.bf16.msra.mxu0 0
  %1105 = vmatprep.subr.bf16.mxu0 0
  %1106 = vmatpush1.bf16.msra.mxu0 0
  %1107 = vmatprep.subr.bf16.mxu0 0
  %1108 = vmatpush1.bf16.msra.mxu0 0
  %1109 = vmatprep.subr.bf16.mxu0 0
  %1110 = vmatpush1.bf16.msra.mxu0 0
  %1111 = vmatprep.subr.bf16.mxu0 0
  %1112 = vmatpush1.bf16.msra.mxu0 0
  %1113 = vmatprep.subr.bf16.mxu0 0
  %1114 = vmatpush1.bf16.msra.mxu0 0
  %1115 = vmatprep.subr.bf16.mxu0 0
  %1116 = vmatpush1.bf16.msra.mxu0 0
  %1117 = vmatprep.subr.bf16.mxu0 0
  %1118 = vmatpush1.bf16.msra.mxu0 0
  %1119 = vmatprep.mubr.bf16.mxu0 0
  %1120 = vmatmul.mubr.bf16.gmra.mrb[0].mxu0 %v1085
  %v1121 = vpop.f32.mrb[0].mxu0
  %v1122 = vadd.f32 0.0, %v1121
  %v1123 = vpop.f32.mrb[0].mxu0
  %v1124 = vpop.f32.mrb[0].mxu0
  %v1125 = vpop.f32.mrb[0].mxu0
  %1126 = vdwg.mxu0
  %v1127 = vadd.f32 %v1081, %v1122
  %v1128 = vmul.f32 %v1127, %v29
  %v1129 = vtanh.pop %v1128
  %v1130 = vadd.f32 %v1129, 1.0
  %v1131 = vmul.f32 %v1130, 0.5
  %v1132 = vsel %vm28, %v1129, %v1131
  %v1133 = vld [vmem:[#allocation5] sm:$0xff]
  %1135 = vrot.lane.b32.xlu0 %v1133, 32
  %v1136 = vpop.permute.xlu0 %1135
  %v1138 = vmul.f32 %v1132, %v1136
  %1140 = vrot.lane.b32.xlu0 %v1132, 64
  %v1141 = vpop.permute.xlu0 %1140
  %v1143 = vmul.f32 %v1132, %v1141
  %1145 = vrot.lane.b32.xlu0 %v1143, 32
  %v1146 = vpop.permute.xlu0 %1145
  %v1148 = vadd.f32 %v1138, %v1146
  %v1149 = vtanh.pop %v1148
  %1151 = vrot.lane.b32.xlu0 %v1149, 64
  %v1152 = vpop.permute.xlu0 %1151
  %v1154 = vmul.f32 %v1132, %v1152
  %1156 = vrot.lane.b32.xlu0 %v1148, 96
  %v1157 = vpop.permute.xlu0 %1156
  %1159 = vst.msk [vmem:[#allocation5] sm:$0xff] %vm147, %v1157
  %1161 = vrot.lane.b32.xlu0 %v1154, 32
  %v1162 = vpop.permute.xlu0 %1161
  %1164 = vst.msk [vmem:[#allocation4] sm:$0xff] %vm147, %v1162
  %v1165 = vld [vmem:[%s334] sm:$0xff]
  %v1166 = vld [vmem:[#allocation4] sm:$0xff]
  %v1167 = vpack.c.bf16 %v1166, %v1166
  %v1169 = vsel %vm147, %v1167, 0
  %1171 = vmatprep.subr.bf16.mxu0 0
  %1172 = vmatpush1.bf16.msra.mxu0 %v996
  %1173 = vmatprep.subr.bf16.mxu0 0
  %1174 = vmatpush1.bf16.msra.mxu0 %v997
  %1175 = vmatprep.subr.bf16.mxu0 0
  %1176 = vmatpush1.bf16.msra.mxu0 0
  %1177 = vmatprep.subr.bf16.mxu0 0
  %1178 = vmatpush1.bf16.msra.mxu0 0
  %1179 = vmatprep.subr.bf16.mxu0 0
  %1180 = vmatpush1.bf16.msra.mxu0 0
  %1181 = vmatprep.subr.bf16.mxu0 0
  %1182 = vmatpush1.bf16.msra.mxu0 0
  %1183 = vmatprep.subr.bf16.mxu0 0
  %1184 = vmatpush1.bf16.msra.mxu0 0
  %1185 = vmatprep.subr.bf16.mxu0 0
  %1186 = vmatpush1.bf16.msra.mxu0 0
  %1187 = vmatprep.subr.bf16.mxu0 0
  %1188 = vmatpush1.bf16.msra.mxu0 0
  %1189 = vmatprep.subr.bf16.mxu0 0
  %1190 = vmatpush1.bf16.msra.mxu0 0
  %1191 = vmatprep.subr.bf16.mxu0 0
  %1192 = vmatpush1.bf16.msra.mxu0 0
  %1193 = vmatprep.subr.bf16.mxu0 0
  %1194 = vmatpush1.bf16.msra.mxu0 0
  %1195 = vmatprep.subr.bf16.mxu0 0
  %1196 = vmatpush1.bf16.msra.mxu0 0
  %1197 = vmatprep.subr.bf16.mxu0 0
  %1198 = vmatpush1.bf16.msra.mxu0 0
  %1199 = vmatprep.subr.bf16.mxu0 0
  %1200 = vmatpush1.bf16.msra.mxu0 0
  %1201 = vmatprep.subr.bf16.mxu0 0
  %1202 = vmatpush1.bf16.msra.mxu0 0
  %1203 = vmatprep.mubr.bf16.mxu0 0
  %1204 = vmatmul.mubr.bf16.gmra.mrb[0].mxu0 %v1169
  %v1205 = vpop.f32.mrb[0].mxu0
  %v1206 = vadd.f32 0.0, %v1205
  %v1207 = vpop.f32.mrb[0].mxu0
  %v1208 = vpop.f32.mrb[0].mxu0
  %v1209 = vpop.f32.mrb[0].mxu0
  %1210 = vdwg.mxu0
  %v1211 = vadd.f32 %v1165, %v1206
  %v1212 = vmul.f32 %v1211, %v29
  %v1213 = vtanh.pop %v1212
  %v1214 = vadd.f32 %v1213, 1.0
  %v1215 = vmul.f32 %v1214, 0.5
  %v1216 = vsel %vm28, %v1213, %v1215
  %v1217 = vld [vmem:[#allocation5] sm:$0xff]
  %1219 = vrot.lane.b32.xlu0 %v1217, 32
  %v1220 = vpop.permute.xlu0 %1219
  %v1222 = vmul.f32 %v1216, %v1220
  %1224 = vrot.lane.b32.xlu0 %v1216, 64
  %v1225 = vpop.permute.xlu0 %1224
  %v1227 = vmul.f32 %v1216, %v1225
  %1229 = vrot.lane.b32.xlu0 %v1227, 32
  %v1230 = vpop.permute.xlu0 %1229
  %v1232 = vadd.f32 %v1222, %v1230
  %v1233 = vtanh.pop %v1232
  %1235 = vrot.lane.b32.xlu0 %v1233, 64
  %v1236 = vpop.permute.xlu0 %1235
  %v1238 = vmul.f32 %v1216, %v1236
  %1240 = vrot.lane.b32.xlu0 %v1232, 96
  %v1241 = vpop.permute.xlu0 %1240
  %1243 = vst.msk [vmem:[#allocation5] sm:$0xff] %vm147, %v1241
  %1245 = vrot.lane.b32.xlu0 %v1238, 32
  %v1246 = vpop.permute.xlu0 %1245
  %1248 = vst.msk [vmem:[#allocation4] sm:$0xff] %vm147, %v1246
  %v1249 = vld [vmem:[%s421] sm:$0xff]
  %v1250 = vld [vmem:[#allocation4] sm:$0xff]
  %v1251 = vpack.c.bf16 %v1250, %v1250
  %v1253 = vsel %vm147, %v1251, 0
  %1255 = vmatprep.subr.bf16.mxu0 0
  %1256 = vmatpush1.bf16.msra.mxu0 %v996
  %1257 = vmatprep.subr.bf16.mxu0 0
  %1258 = vmatpush1.bf16.msra.mxu0 %v997
  %1259 = vmatprep.subr.bf16.mxu0 0
  %1260 = vmatpush1.bf16.msra.mxu0 0
  %1261 = vmatprep.subr.bf16.mxu0 0
  %1262 = vmatpush1.bf16.msra.mxu0 0
  %1263 = vmatprep.subr.bf16.mxu0 0
  %1264 = vmatpush1.bf16.msra.mxu0 0
  %1265 = vmatprep.subr.bf16.mxu0 0
  %1266 = vmatpush1.bf16.msra.mxu0 0
  %1267 = vmatprep.subr.bf16.mxu0 0
  %1268 = vmatpush1.bf16.msra.mxu0 0
  %1269 = vmatprep.subr.bf16.mxu0 0
  %1270 = vmatpush1.bf16.msra.mxu0 0
  %1271 = vmatprep.subr.bf16.mxu0 0
  %1272 = vmatpush1.bf16.msra.mxu0 0
  %1273 = vmatprep.subr.bf16.mxu0 0
  %1274 = vmatpush1.bf16.msra.mxu0 0
  %1275 = vmatprep.subr.bf16.mxu0 0
  %1276 = vmatpush1.bf16.msra.mxu0 0
  %1277 = vmatprep.subr.bf16.mxu0 0
  %1278 = vmatpush1.bf16.msra.mxu0 0
  %1279 = vmatprep.subr.bf16.mxu0 0
  %1280 = vmatpush1.bf16.msra.mxu0 0
  %1281 = vmatprep.subr.bf16.mxu0 0
  %1282 = vmatpush1.bf16.msra.mxu0 0
  %1283 = vmatprep.subr.bf16.mxu0 0
  %1284 = vmatpush1.bf16.msra.mxu0 0
  %1285 = vmatprep.subr.bf16.mxu0 0
  %1286 = vmatpush1.bf16.msra.mxu0 0
  %1287 = vmatprep.mubr.bf16.mxu0 0
  %1288 = vmatmul.mubr.bf16.gmra.mrb[0].mxu0 %v1253
  %v1289 = vpop.f32.mrb[0].mxu0
  %v1290 = vadd.f32 0.0, %v1289
  %v1291 = vpop.f32.mrb[0].mxu0
  %v1292 = vpop.f32.mrb[0].mxu0
  %v1293 = vpop.f32.mrb[0].mxu0
  %1294 = vdwg.mxu0
  %v1295 = vadd.f32 %v1249, %v1290
  %v1296 = vmul.f32 %v1295, %v29
  %v1297 = vtanh.pop %v1296
  %v1298 = vadd.f32 %v1297, 1.0
  %v1299 = vmul.f32 %v1298, 0.5
  %v1300 = vsel %vm28, %v1297, %v1299
  %v1301 = vld [vmem:[#allocation5] sm:$0xff]
  %1303 = vrot.lane.b32.xlu0 %v1301, 32
  %v1304 = vpop.permute.xlu0 %1303
  %v1306 = vmul.f32 %v1300, %v1304
  %1308 = vrot.lane.b32.xlu0 %v1300, 64
  %v1309 = vpop.permute.xlu0 %1308
  %v1311 = vmul.f32 %v1300, %v1309
  %1313 = vrot.lane.b32.xlu0 %v1311, 32
  %v1314 = vpop.permute.xlu0 %1313
  %v1316 = vadd.f32 %v1306, %v1314
  %v1317 = vtanh.pop %v1316
  %1319 = vrot.lane.b32.xlu0 %v1317, 64
  %v1320 = vpop.permute.xlu0 %1319
  %v1322 = vmul.f32 %v1300, %v1320
  %1324 = vrot.lane.b32.xlu0 %v1316, 96
  %v1325 = vpop.permute.xlu0 %1324
  %1327 = vst.msk [vmem:[#allocation5] sm:$0xff] %vm147, %v1325
  %1329 = vrot.lane.b32.xlu0 %v1322, 32
  %v1330 = vpop.permute.xlu0 %1329
  %1332 = vst.msk [vmem:[#allocation4] sm:$0xff] %vm147, %v1330
  %v1333 = vld [vmem:[%s508] sm:$0xff]
  %v1334 = vld [vmem:[#allocation4] sm:$0xff]
  %v1335 = vpack.c.bf16 %v1334, %v1334
  %v1337 = vsel %vm147, %v1335, 0
  %1339 = vmatprep.subr.bf16.mxu0 0
  %1340 = vmatpush1.bf16.msra.mxu0 %v996
  %1341 = vmatprep.subr.bf16.mxu0 0
  %1342 = vmatpush1.bf16.msra.mxu0 %v997
  %1343 = vmatprep.subr.bf16.mxu0 0
  %1344 = vmatpush1.bf16.msra.mxu0 0
  %1345 = vmatprep.subr.bf16.mxu0 0
  %1346 = vmatpush1.bf16.msra.mxu0 0
  %1347 = vmatprep.subr.bf16.mxu0 0
  %1348 = vmatpush1.bf16.msra.mxu0 0
  %1349 = vmatprep.subr.bf16.mxu0 0
  %1350 = vmatpush1.bf16.msra.mxu0 0
  %1351 = vmatprep.subr.bf16.mxu0 0
  %1352 = vmatpush1.bf16.msra.mxu0 0
  %1353 = vmatprep.subr.bf16.mxu0 0
  %1354 = vmatpush1.bf16.msra.mxu0 0
  %1355 = vmatprep.subr.bf16.mxu0 0
  %1356 = vmatpush1.bf16.msra.mxu0 0
  %1357 = vmatprep.subr.bf16.mxu0 0
  %1358 = vmatpush1.bf16.msra.mxu0 0
  %1359 = vmatprep.subr.bf16.mxu0 0
  %1360 = vmatpush1.bf16.msra.mxu0 0
  %1361 = vmatprep.subr.bf16.mxu0 0
  %1362 = vmatpush1.bf16.msra.mxu0 0
  %1363 = vmatprep.subr.bf16.mxu0 0
  %1364 = vmatpush1.bf16.msra.mxu0 0
  %1365 = vmatprep.subr.bf16.mxu0 0
  %1366 = vmatpush1.bf16.msra.mxu0 0
  %1367 = vmatprep.subr.bf16.mxu0 0
  %1368 = vmatpush1.bf16.msra.mxu0 0
  %1369 = vmatprep.subr.bf16.mxu0 0
  %1370 = vmatpush1.bf16.msra.mxu0 0
  %1371 = vmatprep.mubr.bf16.mxu0 0
  %1372 = vmatmul.mubr.bf16.gmra.mrb[0].mxu0 %v1337
  %v1373 = vpop.f32.mrb[0].mxu0
  %v1374 = vadd.f32 0.0, %v1373
  %v1375 = vpop.f32.mrb[0].mxu0
  %v1376 = vpop.f32.mrb[0].mxu0
  %v1377 = vpop.f32.mrb[0].mxu0
  %1378 = vdwg.mxu0
  %v1379 = vadd.f32 %v1333, %v1374
  %v1380 = vmul.f32 %v1379, %v29
  %v1381 = vtanh.pop %v1380
  %v1382 = vadd.f32 %v1381, 1.0
  %v1383 = vmul.f32 %v1382, 0.5
  %v1384 = vsel %vm28, %v1381, %v1383
  %v1385 = vld [vmem:[#allocation5] sm:$0xff]
  %1387 = vrot.lane.b32.xlu0 %v1385, 32
  %v1388 = vpop.permute.xlu0 %1387
  %v1390 = vmul.f32 %v1384, %v1388
  %1392 = vrot.lane.b32.xlu0 %v1384, 64
  %v1393 = vpop.permute.xlu0 %1392
  %v1395 = vmul.f32 %v1384, %v1393
  %1397 = vrot.lane.b32.xlu0 %v1395, 32
  %v1398 = vpop.permute.xlu0 %1397
  %v1400 = vadd.f32 %v1390, %v1398
  %v1401 = vtanh.pop %v1400
  %1403 = vrot.lane.b32.xlu0 %v1401, 64
  %v1404 = vpop.permute.xlu0 %1403
  %v1406 = vmul.f32 %v1384, %v1404
  %1408 = vrot.lane.b32.xlu0 %v1400, 96
  %v1409 = vpop.permute.xlu0 %1408
  %1411 = vst.msk [vmem:[#allocation5] sm:$0xff] %vm147, %v1409
  %1413 = vrot.lane.b32.xlu0 %v1406, 32
  %v1414 = vpop.permute.xlu0 %1413
  %1416 = vst.msk [vmem:[#allocation4] sm:$0xff] %vm147, %v1414
  %v1417 = vld [vmem:[%s595] sm:$0xff]
  %v1418 = vld [vmem:[#allocation4] sm:$0xff]
  %v1419 = vpack.c.bf16 %v1418, %v1418
  %v1421 = vsel %vm147, %v1419, 0
  %1423 = vmatprep.subr.bf16.mxu0 0
  %1424 = vmatpush1.bf16.msra.mxu0 %v996
  %1425 = vmatprep.subr.bf16.mxu0 0
  %1426 = vmatpush1.bf16.msra.mxu0 %v997
  %1427 = vmatprep.subr.bf16.mxu0 0
  %1428 = vmatpush1.bf16.msra.mxu0 0
  %1429 = vmatprep.subr.bf16.mxu0 0
  %1430 = vmatpush1.bf16.msra.mxu0 0
  %1431 = vmatprep.subr.bf16.mxu0 0
  %1432 = vmatpush1.bf16.msra.mxu0 0
  %1433 = vmatprep.subr.bf16.mxu0 0
  %1434 = vmatpush1.bf16.msra.mxu0 0
  %1435 = vmatprep.subr.bf16.mxu0 0
  %1436 = vmatpush1.bf16.msra.mxu0 0
  %1437 = vmatprep.subr.bf16.mxu0 0
  %1438 = vmatpush1.bf16.msra.mxu0 0
  %1439 = vmatprep.subr.bf16.mxu0 0
  %1440 = vmatpush1.bf16.msra.mxu0 0
  %1441 = vmatprep.subr.bf16.mxu0 0
  %1442 = vmatpush1.bf16.msra.mxu0 0
  %1443 = vmatprep.subr.bf16.mxu0 0
  %1444 = vmatpush1.bf16.msra.mxu0 0
  %1445 = vmatprep.subr.bf16.mxu0 0
  %1446 = vmatpush1.bf16.msra.mxu0 0
  %1447 = vmatprep.subr.bf16.mxu0 0
  %1448 = vmatpush1.bf16.msra.mxu0 0
  %1449 = vmatprep.subr.bf16.mxu0 0
  %1450 = vmatpush1.bf16.msra.mxu0 0
  %1451 = vmatprep.subr.bf16.mxu0 0
  %1452 = vmatpush1.bf16.msra.mxu0 0
  %1453 = vmatprep.subr.bf16.mxu0 0
  %1454 = vmatpush1.bf16.msra.mxu0 0
  %1455 = vmatprep.mubr.bf16.mxu0 0
  %1456 = vmatmul.mubr.bf16.gmra.mrb[0].mxu0 %v1421
  %v1457 = vpop.f32.mrb[0].mxu0
  %v1458 = vadd.f32 0.0, %v1457
  %v1459 = vpop.f32.mrb[0].mxu0
  %v1460 = vpop.f32.mrb[0].mxu0
  %v1461 = vpop.f32.mrb[0].mxu0
  %1462 = vdwg.mxu0
  %v1463 = vadd.f32 %v1417, %v1458
  %v1464 = vmul.f32 %v1463, %v29
  %v1465 = vtanh.pop %v1464
  %v1466 = vadd.f32 %v1465, 1.0
  %v1467 = vmul.f32 %v1466, 0.5
  %v1468 = vsel %vm28, %v1465, %v1467
  %v1469 = vld [vmem:[#allocation5] sm:$0xff]
  %1471 = vrot.lane.b32.xlu0 %v1469, 32
  %v1472 = vpop.permute.xlu0 %1471
  %v1474 = vmul.f32 %v1468, %v1472
  %1476 = vrot.lane.b32.xlu0 %v1468, 64
  %v1477 = vpop.permute.xlu0 %1476
  %v1479 = vmul.f32 %v1468, %v1477
  %1481 = vrot.lane.b32.xlu0 %v1479, 32
  %v1482 = vpop.permute.xlu0 %1481
  %v1484 = vadd.f32 %v1474, %v1482
  %v1485 = vtanh.pop %v1484
  %1487 = vrot.lane.b32.xlu0 %v1485, 64
  %v1488 = vpop.permute.xlu0 %1487
  %v1490 = vmul.f32 %v1468, %v1488
  %1492 = vrot.lane.b32.xlu0 %v1484, 96
  %v1493 = vpop.permute.xlu0 %1492
  %1495 = vst.msk [vmem:[#allocation5] sm:$0xff] %vm147, %v1493
  %1497 = vrot.lane.b32.xlu0 %v1490, 32
  %v1498 = vpop.permute.xlu0 %1497
  %1500 = vst.msk [vmem:[#allocation4] sm:$0xff] %vm147, %v1498
  %v1501 = vld [vmem:[%s682] sm:$0xff]
  %v1502 = vld [vmem:[#allocation4] sm:$0xff]
  %v1503 = vpack.c.bf16 %v1502, %v1502
  %v1505 = vsel %vm147, %v1503, 0
  %1507 = vmatprep.subr.bf16.mxu0 0
  %1508 = vmatpush1.bf16.msra.mxu0 %v996
  %1509 = vmatprep.subr.bf16.mxu0 0
  %1510 = vmatpush1.bf16.msra.mxu0 %v997
  %1511 = vmatprep.subr.bf16.mxu0 0
  %1512 = vmatpush1.bf16.msra.mxu0 0
  %1513 = vmatprep.subr.bf16.mxu0 0
  %1514 = vmatpush1.bf16.msra.mxu0 0
  %1515 = vmatprep.subr.bf16.mxu0 0
  %1516 = vmatpush1.bf16.msra.mxu0 0
  %1517 = vmatprep.subr.bf16.mxu0 0
  %1518 = vmatpush1.bf16.msra.mxu0 0
  %1519 = vmatprep.subr.bf16.mxu0 0
  %1520 = vmatpush1.bf16.msra.mxu0 0
  %1521 = vmatprep.subr.bf16.mxu0 0
  %1522 = vmatpush1.bf16.msra.mxu0 0
  %1523 = vmatprep.subr.bf16.mxu0 0
  %1524 = vmatpush1.bf16.msra.mxu0 0
  %1525 = vmatprep.subr.bf16.mxu0 0
  %1526 = vmatpush1.bf16.msra.mxu0 0
  %1527 = vmatprep.subr.bf16.mxu0 0
  %1528 = vmatpush1.bf16.msra.mxu0 0
  %1529 = vmatprep.subr.bf16.mxu0 0
  %1530 = vmatpush1.bf16.msra.mxu0 0
  %1531 = vmatprep.subr.bf16.mxu0 0
  %1532 = vmatpush1.bf16.msra.mxu0 0
  %1533 = vmatprep.subr.bf16.mxu0 0
  %1534 = vmatpush1.bf16.msra.mxu0 0
  %1535 = vmatprep.subr.bf16.mxu0 0
  %1536 = vmatpush1.bf16.msra.mxu0 0
  %1537 = vmatprep.subr.bf16.mxu0 0
  %1538 = vmatpush1.bf16.msra.mxu0 0
  %1539 = vmatprep.mubr.bf16.mxu0 0
  %1540 = vmatmul.mubr.bf16.gmra.mrb[0].mxu0 %v1505
  %v1541 = vpop.f32.mrb[0].mxu0
  %v1542 = vadd.f32 0.0, %v1541
  %v1543 = vpop.f32.mrb[0].mxu0
  %v1544 = vpop.f32.mrb[0].mxu0
  %v1545 = vpop.f32.mrb[0].mxu0
  %1546 = vdwg.mxu0
  %v1547 = vadd.f32 %v1501, %v1542
  %v1548 = vmul.f32 %v1547, %v29
  %v1549 = vtanh.pop %v1548
  %v1550 = vadd.f32 %v1549, 1.0
  %v1551 = vmul.f32 %v1550, 0.5
  %v1552 = vsel %vm28, %v1549, %v1551
  %v1553 = vld [vmem:[#allocation5] sm:$0xff]
  %1555 = vrot.lane.b32.xlu0 %v1553, 32
  %v1556 = vpop.permute.xlu0 %1555
  %v1558 = vmul.f32 %v1552, %v1556
  %1560 = vrot.lane.b32.xlu0 %v1552, 64
  %v1561 = vpop.permute.xlu0 %1560
  %v1563 = vmul.f32 %v1552, %v1561
  %1565 = vrot.lane.b32.xlu0 %v1563, 32
  %v1566 = vpop.permute.xlu0 %1565
  %v1568 = vadd.f32 %v1558, %v1566
  %v1569 = vtanh.pop %v1568
  %1571 = vrot.lane.b32.xlu0 %v1569, 64
  %v1572 = vpop.permute.xlu0 %1571
  %v1574 = vmul.f32 %v1552, %v1572
  %1576 = vrot.lane.b32.xlu0 %v1568, 96
  %v1577 = vpop.permute.xlu0 %1576
  %1579 = vst.msk [vmem:[#allocation5] sm:$0xff] %vm147, %v1577
  %1581 = vrot.lane.b32.xlu0 %v1574, 32
  %v1582 = vpop.permute.xlu0 %1581
  %1584 = vst.msk [vmem:[#allocation4] sm:$0xff] %vm147, %v1582
  %v1585 = vld [vmem:[%s769] sm:$0xff]
  %v1586 = vld [vmem:[#allocation4] sm:$0xff]
  %v1587 = vpack.c.bf16 %v1586, %v1586
  %v1589 = vsel %vm147, %v1587, 0
  %1591 = vmatprep.subr.bf16.mxu0 0
  %1592 = vmatpush1.bf16.msra.mxu0 %v996
  %1593 = vmatprep.subr.bf16.mxu0 0
  %1594 = vmatpush1.bf16.msra.mxu0 %v997
  %1595 = vmatprep.subr.bf16.mxu0 0
  %1596 = vmatpush1.bf16.msra.mxu0 0
  %1597 = vmatprep.subr.bf16.mxu0 0
  %1598 = vmatpush1.bf16.msra.mxu0 0
  %1599 = vmatprep.subr.bf16.mxu0 0
  %1600 = vmatpush1.bf16.msra.mxu0 0
  %1601 = vmatprep.subr.bf16.mxu0 0
  %1602 = vmatpush1.bf16.msra.mxu0 0
  %1603 = vmatprep.subr.bf16.mxu0 0
  %1604 = vmatpush1.bf16.msra.mxu0 0
  %1605 = vmatprep.subr.bf16.mxu0 0
  %1606 = vmatpush1.bf16.msra.mxu0 0
  %1607 = vmatprep.subr.bf16.mxu0 0
  %1608 = vmatpush1.bf16.msra.mxu0 0
  %1609 = vmatprep.subr.bf16.mxu0 0
  %1610 = vmatpush1.bf16.msra.mxu0 0
  %1611 = vmatprep.subr.bf16.mxu0 0
  %1612 = vmatpush1.bf16.msra.mxu0 0
  %1613 = vmatprep.subr.bf16.mxu0 0
  %1614 = vmatpush1.bf16.msra.mxu0 0
  %1615 = vmatprep.subr.bf16.mxu0 0
  %1616 = vmatpush1.bf16.msra.mxu0 0
  %1617 = vmatprep.subr.bf16.mxu0 0
  %1618 = vmatpush1.bf16.msra.mxu0 0
  %1619 = vmatprep.subr.bf16.mxu0 0
  %1620 = vmatpush1.bf16.msra.mxu0 0
  %1621 = vmatprep.subr.bf16.mxu0 0
  %1622 = vmatpush1.bf16.msra.mxu0 0
  %1623 = vmatprep.mubr.bf16.mxu0 0
  %1624 = vmatmul.mubr.bf16.gmra.mrb[0].mxu0 %v1589
  %v1625 = vpop.f32.mrb[0].mxu0
  %v1626 = vadd.f32 0.0, %v1625
  %v1627 = vpop.f32.mrb[0].mxu0
  %v1628 = vpop.f32.mrb[0].mxu0
  %v1629 = vpop.f32.mrb[0].mxu0
  %1630 = vdwg.mxu0
  %v1631 = vadd.f32 %v1585, %v1626
  %v1632 = vmul.f32 %v1631, %v29
  %v1633 = vtanh.pop %v1632
  %v1634 = vadd.f32 %v1633, 1.0
  %v1635 = vmul.f32 %v1634, 0.5
  %v1636 = vsel %vm28, %v1633, %v1635
  %v1637 = vld [vmem:[#allocation5] sm:$0xff]
  %1639 = vrot.lane.b32.xlu0 %v1637, 32
  %v1640 = vpop.permute.xlu0 %1639
  %v1642 = vmul.f32 %v1636, %v1640
  %1644 = vrot.lane.b32.xlu0 %v1636, 64
  %v1645 = vpop.permute.xlu0 %1644
  %v1647 = vmul.f32 %v1636, %v1645
  %1649 = vrot.lane.b32.xlu0 %v1647, 32
  %v1650 = vpop.permute.xlu0 %1649
  %v1652 = vadd.f32 %v1642, %v1650
  %v1653 = vtanh.pop %v1652
  %1655 = vrot.lane.b32.xlu0 %v1653, 64
  %v1656 = vpop.permute.xlu0 %1655
  %v1658 = vmul.f32 %v1636, %v1656
  %1660 = vrot.lane.b32.xlu0 %v1652, 96
  %v1661 = vpop.permute.xlu0 %1660
  %1663 = vst.msk [vmem:[#allocation5] sm:$0xff] %vm147, %v1661
  %1665 = vrot.lane.b32.xlu0 %v1658, 32
  %v1666 = vpop.permute.xlu0 %1665
  %1668 = vst.msk [vmem:[#allocation4] sm:$0xff] %vm147, %v1666
  %v1669 = vld [vmem:[#allocation4] sm:$0xff]
  %v1670 = vpack.c.bf16 %v1669, %v1669
  %v1671 = vld [vmem:[%s4] sm:$0xf]
  %v1672 = vld [vmem:[%s4 + $0x4] sm:$0xf]
  %v1673 = vld [vmem:[%s4 + $0x8] sm:$0xf]
  %v1674 = vld [vmem:[%s4 + $0xc] sm:$0xf]
  %v1675 = vld [vmem:[%s5] sm:$0x1]
  %v1677 = vlaneseq
  %v1678 = vshrl.u32 %v1677, 7
  %v1679 = vsub.s32 0, %v1678
  %v1680 = vrot.slane %v1675, %v1679
  %v1686 = vunpack.c.l.b16 %v1671
  %v1687 = vunpack.c.l.b16 %v1672
  %v1688 = vunpack.c.l.b16 %v1673
  %v1689 = vunpack.c.l.b16 %v1674
  %v1690 = vpack.c.b16 %v1687, %v1686
  %v1691 = vpack.c.b16 %v1689, %v1688
  %v1695 = vsel %vm147, %v1670, 0
  %1697 = vmatprep.subr.bf16.mxu0 0
  %1698 = vmatpush1.bf16.msra.mxu0 %v1690
  %1699 = vmatprep.subr.bf16.mxu0 0
  %1700 = vmatpush1.bf16.msra.mxu0 %v1691
  %1701 = vmatprep.subr.bf16.mxu0 0
  %1702 = vmatpush1.bf16.msra.mxu0 0
  %1703 = vmatprep.subr.bf16.mxu0 0
  %1704 = vmatpush1.bf16.msra.mxu0 0
  %1705 = vmatprep.subr.bf16.mxu0 0
  %1706 = vmatpush1.bf16.msra.mxu0 0
  %1707 = vmatprep.subr.bf16.mxu0 0
  %1708 = vmatpush1.bf16.msra.mxu0 0
  %1709 = vmatprep.subr.bf16.mxu0 0
  %1710 = vmatpush1.bf16.msra.mxu0 0
  %1711 = vmatprep.subr.bf16.mxu0 0
  %1712 = vmatpush1.bf16.msra.mxu0 0
  %1713 = vmatprep.subr.bf16.mxu0 0
  %1714 = vmatpush1.bf16.msra.mxu0 0
  %1715 = vmatprep.subr.bf16.mxu0 0
  %1716 = vmatpush1.bf16.msra.mxu0 0
  %1717 = vmatprep.subr.bf16.mxu0 0
  %1718 = vmatpush1.bf16.msra.mxu0 0
  %1719 = vmatprep.subr.bf16.mxu0 0
  %1720 = vmatpush1.bf16.msra.mxu0 0
  %1721 = vmatprep.subr.bf16.mxu0 0
  %1722 = vmatpush1.bf16.msra.mxu0 0
  %1723 = vmatprep.subr.bf16.mxu0 0
  %1724 = vmatpush1.bf16.msra.mxu0 0
  %1725 = vmatprep.subr.bf16.mxu0 0
  %1726 = vmatpush1.bf16.msra.mxu0 0
  %1727 = vmatprep.subr.bf16.mxu0 0
  %1728 = vmatpush1.bf16.msra.mxu0 0
  %1729 = vmatprep.mubr.bf16.mxu0 0
  %1730 = vmatmul.mubr.bf16.gmra.mrb[0].mxu0 %v1695
  %v1731 = vpop.f32.mrb[0].mxu0
  %v1732 = vadd.f32 %v1680, %v1731
  %v1733 = vpop.f32.mrb[0].mxu0
  %v1734 = vpop.f32.mrb[0].mxu0
  %v1735 = vpop.f32.mrb[0].mxu0
  %1736 = vdwg.mxu0
  %v1737 = vxor.u32 %v1732, 2147483648
  %v1738 = vmul.f32 %v1737, 1.442695
  %v1739 = vpow.pop %v1738
  %v1740 = vadd.f32 %v1739, 1.0
  %v1741 = vrcp.pop %v1740
  %v1742 = vmul.f32 1.0, %v1741
  %1743 = vst [vmem:[%s6] sm:$0xff] %v1742
  // Predicated region
  $region26: #{sentiment_forward.1} parent=0 // pred_check
    _
  $region27: #{sentiment_forward.1} parent=0 // pred_check_branch
    %1745 = sbr.rel (0) target = $region29
  $region28: #{sentiment_forward.1} parent=0 // pred_region
    _
  $region29: #{sentiment_forward.1} parent=0 // pred_fallthru
    _
  // Predicated region
  $region30: #{sentiment_forward.1} parent=0 // pred_check
    _
  $region31: #{sentiment_forward.1} parent=0 // pred_check_branch
    %1747 = sbr.rel (0) target = $region33
  $region32: #{sentiment_forward.1} parent=0 // pred_region
    _
  $region33: #{sentiment_forward.1} parent=0 // pred_fallthru
    _

</llo_original>
